<compile_context>
chip_gen: v7x
topology: tpu7x:2x2x1
jax: 0.10.0
libtpu: 0.0.40
codegen_flags: <defaults>
</compile_context>

<pallas_src>
import math

import jax
import jax.numpy as jnp
from jax.experimental import pallas as pl
from jax.experimental.pallas import tpu as pltpu

EPS = 1e-6


def _cdiv(a, b):
    return (a + b - 1) // b


def _round_up(x, m):
    return ((x + m - 1) // m) * m


# ----------------------------------------------------------------------------
# Per-generation VMEM plan.
# ----------------------------------------------------------------------------
_VMEM_PLAN = None


def _vmem_plan():
    """Returns (vmem_limit_bytes, tile_budget_bytes, balance_cores)."""
    global _VMEM_PLAN
    if _VMEM_PLAN is None:
        cap = 64 * 1024 * 1024  # conservative default: v7x per-TC VMEM
        try:
            info = pltpu.get_tpu_info()
            c = getattr(info, "vmem_capacity_bytes", None)
            if c:
                cap = int(c)
        except Exception:
            pass
        if cap >= 128 * 1024 * 1024:
            # v5e / v6e: 128 MiB physical VMEM -> raise scoped limit, big tiles.
            _VMEM_PLAN = (64 * 1024 * 1024, 40 * 1024 * 1024, False)
        else:
            # v7x: 64 MiB per TC, 2 TCs -> headroom + keep both cores busy.
            _VMEM_PLAN = (48 * 1024 * 1024, 24 * 1024 * 1024, True)
    return _VMEM_PLAN


def _choose_tm(rows, size, itemsize, group, tile_budget, balance_cores):
    """Row tile: as large as the per-generation VMEM budget allows.

    Per grid step Pallas double-buffers each tensor's input and output row
    block (2x in + 2x out per tensor) and the kernel forms ~3 f32 temps per
    tensor.  Multiple of 16 so bf16 inputs (16-row sublane packing) stay well
    laid out."""
    per_row = group * size * (2 * itemsize + 2 * itemsize + 3 * 4)
    cap = tile_budget // max(per_row, 1)
    tm = min(2048, cap)
    if balance_cores:
        # v7x: keep >= ~8 row tiles so the two TensorCores stay load-balanced,
        # but never drop below 256 rows/tile (already ~85% of HBM roofline).
        tm = min(tm, max(256, _round_up(_cdiv(rows, 8), 16)))
    tm = max(16, (tm // 16) * 16)
    tm = min(tm, _round_up(rows, 16))
    return tm


# ----------------------------------------------------------------------------
# Kernel: G independent LayerNorms (one per tensor of the shape group), each
# with its own gamma/beta row out of a single fully-resident (2G, size) block.
# ----------------------------------------------------------------------------
def _make_kernel(G, size, use_mxu):
    inv_n = 1.0 / size
    inv_nm1 = 1.0 / max(size - 1, 1)

    def kernel(gb_ref, *refs):
        # refs = (x_0..x_{G-1}, o_0..o_{G-1}); each (TM, SIZE).
        if use_mxu:
            ones = jnp.ones((size, 1), jnp.float32)  # hoisted out of the loop
        for g in range(G):
            x_ref = refs[g]
            o_ref = refs[G + g]
            x = x_ref[...].astype(jnp.float32)
            if use_mxu:
                # Cross-lane reductions on the idle MXU (vector-extended slot)
                # instead of the XLU: binding unit on v7x, neutral elsewhere.
                s1 = jnp.dot(x, ones, preferred_element_type=jnp.float32)
                s2 = jnp.dot(x * x, ones, preferred_element_type=jnp.float32)
            else:
                s1 = jnp.sum(x, axis=-1, keepdims=True)
                s2 = jnp.sum(x * x, axis=-1, keepdims=True)
            mean = s1 * inv_n
            # torch.std default is unbiased (N-1); eps is added to std.
            var = jnp.maximum((s2 - s1 * mean) * inv_nm1, 0.0)
            d = jnp.sqrt(var) + EPS
            # EUP approx reciprocal (free slot) + one Newton step on the VPU.
            inv0 = pl.reciprocal(d, approx=True)
            inv = inv0 * (2.0 - d * inv0)
            gamma = gb_ref[2 * g : 2 * g + 1, :]
            beta = gb_ref[2 * g + 1 : 2 * g + 2, :]
            o_ref[...] = ((x - mean) * inv * gamma + beta).astype(o_ref.dtype)

    return kernel


def _build_group_fn(G, rows, size, dtype, tm, vmem_limit, use_mxu):
    grid = (_cdiv(rows, tm),)
    kernel = _make_kernel(G, size, use_mxu)
    row_specs = [pl.BlockSpec((tm, size), lambda i: (i, 0)) for _ in range(G)]
    fn = pl.pallas_call(
        kernel,
        out_shape=tuple(jax.ShapeDtypeStruct((rows, size), dtype) for _ in range(G)),
        grid_spec=pltpu.PrefetchScalarGridSpec(
            num_scalar_prefetch=0,
            grid=grid,
            in_specs=[
                # gamma/beta for the whole group: tiny, fully resident
                # (constant index_map -> DMA'd once, no per-step dependency).
                pl.BlockSpec((2 * G, size), lambda i: (0, 0)),
            ]
            + row_specs,
            out_specs=[pl.BlockSpec((tm, size), lambda i: (i, 0)) for _ in range(G)],
        ),
        compiler_params=pltpu.CompilerParams(
            dimension_semantics=("parallel",),
            vmem_limit_bytes=vmem_limit,
        ),
    )
    return jax.jit(fn)


_FN_CACHE = {}


def _get_group_fn(G, rows, size, dtype, use_mxu):
    key = (G, rows, size, jnp.dtype(dtype).name, bool(use_mxu))
    fn = _FN_CACHE.get(key)
    if fn is None:
        vmem_limit, tile_budget, balance_cores = _vmem_plan()
        tm = _choose_tm(rows, size, jnp.dtype(dtype).itemsize, G, tile_budget,
                        balance_cores)
        fn = _build_group_fn(G, rows, size, jnp.dtype(dtype), tm, vmem_limit,
                             use_mxu)
        _FN_CACHE[key] = fn
    return fn


# ----------------------------------------------------------------------------
# Pure-JAX reference (torch semantics: unbiased std, eps added to std).
# ----------------------------------------------------------------------------
def _ref_layernorm(x, gamma, beta):
    x = x.astype(jnp.float32)
    mean = jnp.mean(x, axis=-1, keepdims=True)
    diff = x - mean
    var = jnp.sum(diff * diff, axis=-1, keepdims=True) / (x.shape[-1] - 1)
    std = jnp.sqrt(var)
    return gamma * diff / (std + EPS) + beta


# One-time runtime probe: only use the MXU dot-with-ones reductions if this
# chip's f32 Pallas matmul reproduces the exact-f32 LayerNorm well inside the
# 1e-4 tolerance (covers both lowering support and matmul precision).
_MXU_OK = {}


def _use_mxu_reductions(size):
    if size not in _MXU_OK:
        ok = False
        try:
            rows = 256
            vmem_limit, _, _ = _vmem_plan()
            fn = _build_group_fn(1, rows, size, jnp.dtype(jnp.float32),
                                 min(256, _round_up(rows, 16)), vmem_limit,
                                 use_mxu=True)
            k = jax.random.PRNGKey(1234)
            kx, kg, kb = jax.random.split(k, 3)
            x = 1.7 * jax.random.normal(kx, (rows, size), jnp.float32) + 0.3
            gamma = 1.0 + 0.1 * jax.random.normal(kg, (size,), jnp.float32)
            beta = 0.1 * jax.random.normal(kb, (size,), jnp.float32)
            out = fn(jnp.stack([gamma, beta], axis=0), x)[0]
            ref = _ref_layernorm(x, gamma, beta)
            ok = bool(jnp.allclose(out, ref, atol=2e-5, rtol=2e-5))
        except Exception:
            ok = False
        _MXU_OK[size] = ok
    return _MXU_OK[size]


# ----------------------------------------------------------------------------
# Encoder wrapper (mirrors the PyTorch module's structural walk).
# ----------------------------------------------------------------------------
class EncoderPallas:
    """JAX/Pallas port of the PyTorch Encoder module.

    Holds `nb_layers` independent LayerNorm parameter pairs (a_2, b_2) of
    shape (size,) and applies them, in order, to the flattened structure of
    the input sequences.  All LayerNorms operating on tensors of the same
    shape/dtype are fused into a single pallas_call (one ref per tensor, so
    no stacking copy is ever made)."""

    def __init__(self, size, nb_layers, key):
        self.size = size
        self.nb_layers = nb_layers
        self.params = []
        self._gb_cache = {}
        for _ in range(nb_layers):
            kg, kb, key = jax.random.split(key, 3)
            # Deterministic, non-trivial init around the PyTorch defaults
            # (a_2 = ones, b_2 = zeros) so the kernel math is exercised.
            gamma = 1.0 + 0.1 * jax.random.normal(kg, (size,), jnp.float32)
            beta = 0.1 * jax.random.normal(kb, (size,), jnp.float32)
            self.params.append((gamma, beta))

    def _gb_for(self, layer_idxs):
        key = tuple(layer_idxs)
        gb = self._gb_cache.get(key)
        if gb is None:
            rows = []
            for li in layer_idxs:
                rows.append(self.params[li][0])
                rows.append(self.params[li][1])
            gb = jnp.stack(rows, axis=0)  # (2G, size), a few KiB
            self._gb_cache[key] = gb
        return gb

    def __call__(self, *seqs):
        # 1) Walk the seqs structure exactly like the torch forward, recording
        #    (tensor, layer index) pairs plus the output structure.
        flat_inputs = []   # list of (tensor, layer_idx)
        structure = []     # ("tensor", flat_idx) or ("list", [flat_idx, ...])
        i = 0
        seq_i = 0
        while True:
            if isinstance(seqs[seq_i], list):
                idxs = []
                for seq in seqs[seq_i]:
                    flat_inputs.append((seq, i))
                    idxs.append(len(flat_inputs) - 1)
                    i += 1
                structure.append(("list", idxs))
                seq_i += 1
            else:
                flat_inputs.append((seqs[seq_i], i))
                structure.append(("tensor", len(flat_inputs) - 1))
                i += 1
                seq_i += 1
            if i == self.nb_layers:
                break

        # 2) Group tensors by (shape, dtype) and run ONE fused pallas_call per
        #    group.  Tensors are passed as separate refs; the 2-D reshape is
        #    metadata-only, so there is no extra HBM pass.
        results = [None] * len(flat_inputs)
        groups = {}
        for flat_idx, (x, li) in enumerate(flat_inputs):
            assert x.shape[-1] == self.size, "last dim must equal LayerNorm size"
            gkey = (tuple(x.shape), jnp.dtype(x.dtype).name)
            groups.setdefault(gkey, []).append((flat_idx, x, li))

        use_mxu = _use_mxu_reductions(self.size)
        for (shape, dtype_name), items in groups.items():
            G = len(items)
            rows = math.prod(shape[:-1])
            xs2d = [x.reshape(rows, self.size) for _, x, _ in items]
            gb = self._gb_for(tuple(li for _, _, li in items))
            fn = _get_group_fn(G, rows, self.size, jnp.dtype(dtype_name), use_mxu)
            outs = fn(gb, *xs2d)
            for (flat_idx, x, _), o in zip(items, outs):
                results[flat_idx] = o.reshape(x.shape)

        # 3) Rebuild the output structure.
        output = []
        for kind, payload in structure:
            if kind == "list":
                output.append([results[j] for j in payload])
            else:
                output.append(results[payload])
        return output


if __name__ == "__main__":
    key = jax.random.PRNGKey(0)
    k0, k1, k2, kparams = jax.random.split(key, 4)

    batch, seq, size = 2, 8, 128
    nb_layers = 3

    # seqs structure: one plain tensor followed by a list of two tensors
    # (consumes exactly nb_layers = 3 LayerNorms, mirroring the torch forward).
    x0 = jax.random.normal(k0, (batch, seq, size), jnp.float32)
    x1 = jax.random.normal(k1, (batch, seq, size), jnp.float32)
    x2 = jax.random.normal(k2, (batch, seq, size), jnp.float32)

    enc = EncoderPallas(size, nb_layers, kparams)
    out = enc(x0, [x1, x2])

    # Block on all outputs.
    flat = [out[0], out[1][0], out[1][1]]
    for o in flat:
        jax.block_until_ready(o)

    # Correctness check against the pure-JAX reference.
    refs = [
        _ref_layernorm(x0, *enc.params[0]),
        _ref_layernorm(x1, *enc.params[1]),
        _ref_layernorm(x2, *enc.params[2]),
    ]
    for got, ref in zip(flat, refs):
        assert got.shape == ref.shape, "shape mismatch vs reference"
        assert jnp.allclose(got, ref, atol=1e-4, rtol=1e-4), "mismatch vs reference"

    print("KERNEL_OK")
</pallas_src>

<mosaic_0001>
module attributes {stable_mosaic.version = 11 : i64} {
  func.func @kernel(%arg0: i32, %arg1: memref<2x128xf32, #tpu.memory_space<vmem>>, %arg2: memref<256x128xf32, #tpu.memory_space<vmem>>, %arg3: memref<256x128xf32, #tpu.memory_space<vmem>>) attributes {dimension_semantics = [#tpu.dimension_semantics<parallel>], iteration_bounds = array<i64: 1>, scalar_prefetch = 0 : i64, scratch_operands = 0 : i64, tpu.core_type = #tpu.core_type<tc>, window_params = [{pipeline_mode = #tpu.pipeline_mode<synchronous>, transform_indices = @transform_0, window_bounds = array<i64: 2, 128>}, {transform_indices = @transform_1, window_bounds = array<i64: 256, 128>}, {transform_indices = @transform_2, window_bounds = array<i64: 256, 128>}]} {
    %cst = arith.constant 1.000000e+00 : f32
    %0 = vector.broadcast %cst : f32 to vector<128x1xf32>
    %c0 = arith.constant 0 : index
    %c0_0 = arith.constant 0 : index
    %1 = vector.load %arg2[%c0, %c0_0] : memref<256x128xf32, #tpu.memory_space<vmem>>, vector<256x128xf32>
    %cst_1 = arith.constant dense<0.000000e+00> : vector<256x1xf32>
    %2 = tpu.matmul %1, %0, %cst_1 {dimension_numbers = #tpu.dot_dimension_numbers<[1], [0], [0], [1], [0, 0, 1, 1], [], []>} : vector<256x128xf32>, vector<128x1xf32>, vector<256x1xf32> -> vector<256x1xf32>
    %3 = arith.mulf %1, %1 : vector<256x128xf32>
    %cst_2 = arith.constant dense<0.000000e+00> : vector<256x1xf32>
    %4 = tpu.matmul %3, %0, %cst_2 {dimension_numbers = #tpu.dot_dimension_numbers<[1], [0], [0], [1], [0, 0, 1, 1], [], []>} : vector<256x128xf32>, vector<128x1xf32>, vector<256x1xf32> -> vector<256x1xf32>
    %cst_3 = arith.constant 7.812500e-03 : f32
    %5 = vector.broadcast %cst_3 : f32 to vector<256x1xf32>
    %6 = arith.mulf %2, %5 : vector<256x1xf32>
    %7 = arith.mulf %2, %6 : vector<256x1xf32>
    %8 = arith.subf %4, %7 : vector<256x1xf32>
    %cst_4 = arith.constant 0.00787401571 : f32
    %9 = vector.broadcast %cst_4 : f32 to vector<256x1xf32>
    %10 = arith.mulf %8, %9 : vector<256x1xf32>
    %cst_5 = arith.constant 0.000000e+00 : f32
    %11 = vector.broadcast %cst_5 : f32 to vector<256x1xf32>
    %12 = arith.maximumf %10, %11 : vector<256x1xf32>
    %13 = math.sqrt %12 : vector<256x1xf32>
    %cst_6 = arith.constant 9.99999997E-7 : f32
    %14 = vector.broadcast %cst_6 : f32 to vector<256x1xf32>
    %15 = arith.addf %13, %14 : vector<256x1xf32>
    %16 = tpu.reciprocal %15 {approx = true} : vector<256x1xf32> -> vector<256x1xf32>
    %17 = arith.mulf %15, %16 : vector<256x1xf32>
    %cst_7 = arith.constant 2.000000e+00 : f32
    %18 = vector.broadcast %cst_7 : f32 to vector<256x1xf32>
    %19 = arith.subf %18, %17 : vector<256x1xf32>
    %20 = arith.mulf %16, %19 : vector<256x1xf32>
    %c0_8 = arith.constant 0 : index
    %c0_9 = arith.constant 0 : index
    %21 = vector.load %arg1[%c0_8, %c0_9] : memref<2x128xf32, #tpu.memory_space<vmem>>, vector<1x128xf32>
    %c1 = arith.constant 1 : index
    %c0_10 = arith.constant 0 : index
    %22 = vector.load %arg1[%c1, %c0_10] : memref<2x128xf32, #tpu.memory_space<vmem>>, vector<1x128xf32>
    %23 = vector.broadcast %6 : vector<256x1xf32> to vector<256x128xf32>
    %24 = arith.subf %1, %23 : vector<256x128xf32>
    %25 = vector.broadcast %20 : vector<256x1xf32> to vector<256x128xf32>
    %26 = arith.mulf %24, %25 : vector<256x128xf32>
    %27 = vector.broadcast %21 : vector<1x128xf32> to vector<256x128xf32>
    %28 = arith.mulf %26, %27 : vector<256x128xf32>
    %29 = vector.broadcast %22 : vector<1x128xf32> to vector<256x128xf32>
    %30 = arith.addf %28, %29 : vector<256x128xf32>
    %c0_11 = arith.constant 0 : index
    %c0_12 = arith.constant 0 : index
    %31 = vector.load %arg3[%c0_11, %c0_12] : memref<256x128xf32, #tpu.memory_space<vmem>>, vector<256x128xf32>
    tpu.vector_store %arg3[%c0_11, %c0_12], %30 {strides = array<i32>} : memref<256x128xf32, #tpu.memory_space<vmem>>, vector<256x128xf32>,
    return
  }
  func.func @transform_0(%arg0: i32) -> (i32, i32) {
    %c0_i32 = arith.constant 0 : i32
    %c0_i32_0 = arith.constant 0 : i32
    %c0_i32_1 = arith.constant 0 : i32
    return %c0_i32, %c0_i32_0 : i32, i32
  }
  func.func @transform_1(%arg0: i32) -> (i32, i32) {
    %c0_i32 = arith.constant 0 : i32
    %c0_i32_0 = arith.constant 0 : i32
    return %arg0, %c0_i32 : i32, i32
  }
  func.func @transform_2(%arg0: i32) -> (i32, i32) {
    %c0_i32 = arith.constant 0 : i32
    %c0_i32_0 = arith.constant 0 : i32
    return %arg0, %c0_i32 : i32, i32
  }
}

module attributes {stable_mosaic.version = 11 : i64} {
  func.func @kernel(%arg0: i32, %arg1: memref<6x128xf32, #tpu.memory_space<vmem>>, %arg2: memref<16x128xf32, #tpu.memory_space<vmem>>, %arg3: memref<16x128xf32, #tpu.memory_space<vmem>>, %arg4: memref<16x128xf32, #tpu.memory_space<vmem>>, %arg5: memref<16x128xf32, #tpu.memory_space<vmem>>, %arg6: memref<16x128xf32, #tpu.memory_space<vmem>>, %arg7: memref<16x128xf32, #tpu.memory_space<vmem>>) attributes {dimension_semantics = [#tpu.dimension_semantics<parallel>], iteration_bounds = array<i64: 1>, scalar_prefetch = 0 : i64, scratch_operands = 0 : i64, tpu.core_type = #tpu.core_type<tc>, window_params = [{pipeline_mode = #tpu.pipeline_mode<synchronous>, transform_indices = @transform_0, window_bounds = array<i64: 6, 128>}, {transform_indices = @transform_1, window_bounds = array<i64: 16, 128>}, {transform_indices = @transform_2, window_bounds = array<i64: 16, 128>}, {transform_indices = @transform_3, window_bounds = array<i64: 16, 128>}, {transform_indices = @transform_4, window_bounds = array<i64: 16, 128>}, {transform_indices = @transform_5, window_bounds = array<i64: 16, 128>}, {transform_indices = @transform_6, window_bounds = array<i64: 16, 128>}]} {
    %c0 = arith.constant 0 : index
    %c0_0 = arith.constant 0 : index
    %0 = vector.load %arg2[%c0, %c0_0] : memref<16x128xf32, #tpu.memory_space<vmem>>, vector<16x128xf32>
    %cst = arith.constant dense<0.000000e+00> : vector<16xf32>
    %1 = vector.multi_reduction <add>, %0, %cst [1] : vector<16x128xf32> to vector<16xf32>
    %2 = vector.shape_cast %1 : vector<16xf32> to vector<16x1xf32>
    %3 = arith.mulf %0, %0 : vector<16x128xf32>
    %cst_1 = arith.constant dense<0.000000e+00> : vector<16xf32>
    %4 = vector.multi_reduction <add>, %3, %cst_1 [1] : vector<16x128xf32> to vector<16xf32>
    %5 = vector.shape_cast %4 : vector<16xf32> to vector<16x1xf32>
    %cst_2 = arith.constant 7.812500e-03 : f32
    %6 = vector.broadcast %cst_2 : f32 to vector<16x1xf32>
    %7 = arith.mulf %2, %6 : vector<16x1xf32>
    %8 = arith.mulf %2, %7 : vector<16x1xf32>
    %9 = arith.subf %5, %8 : vector<16x1xf32>
    %cst_3 = arith.constant 0.00787401571 : f32
    %10 = vector.broadcast %cst_3 : f32 to vector<16x1xf32>
    %11 = arith.mulf %9, %10 : vector<16x1xf32>
    %cst_4 = arith.constant 0.000000e+00 : f32
    %12 = vector.broadcast %cst_4 : f32 to vector<16x1xf32>
    %13 = arith.maximumf %11, %12 : vector<16x1xf32>
    %14 = math.sqrt %13 : vector<16x1xf32>
    %cst_5 = arith.constant 9.99999997E-7 : f32
    %15 = vector.broadcast %cst_5 : f32 to vector<16x1xf32>
    %16 = arith.addf %14, %15 : vector<16x1xf32>
    %17 = tpu.reciprocal %16 {approx = true} : vector<16x1xf32> -> vector<16x1xf32>
    %18 = arith.mulf %16, %17 : vector<16x1xf32>
    %cst_6 = arith.constant 2.000000e+00 : f32
    %19 = vector.broadcast %cst_6 : f32 to vector<16x1xf32>
    %20 = arith.subf %19, %18 : vector<16x1xf32>
    %21 = arith.mulf %17, %20 : vector<16x1xf32>
    %c0_7 = arith.constant 0 : index
    %c0_8 = arith.constant 0 : index
    %22 = vector.load %arg1[%c0_7, %c0_8] : memref<6x128xf32, #tpu.memory_space<vmem>>, vector<1x128xf32>
    %c1 = arith.constant 1 : index
    %c0_9 = arith.constant 0 : index
    %23 = vector.load %arg1[%c1, %c0_9] : memref<6x128xf32, #tpu.memory_space<vmem>>, vector<1x128xf32>
    %24 = vector.broadcast %7 : vector<16x1xf32> to vector<16x128xf32>
    %25 = arith.subf %0, %24 : vector<16x128xf32>
    %26 = vector.broadcast %21 : vector<16x1xf32> to vector<16x128xf32>
    %27 = arith.mulf %25, %26 : vector<16x128xf32>
    %28 = vector.broadcast %22 : vector<1x128xf32> to vector<16x128xf32>
    %29 = arith.mulf %27, %28 : vector<16x128xf32>
    %30 = vector.broadcast %23 : vector<1x128xf32> to vector<16x128xf32>
    %31 = arith.addf %29, %30 : vector<16x128xf32>
    %c0_10 = arith.constant 0 : index
    %c0_11 = arith.constant 0 : index
    %32 = vector.load %arg5[%c0_10, %c0_11] : memref<16x128xf32, #tpu.memory_space<vmem>>, vector<16x128xf32>
    tpu.vector_store %arg5[%c0_10, %c0_11], %31 {strides = array<i32>} : memref<16x128xf32, #tpu.memory_space<vmem>>, vector<16x128xf32>,
    %c0_12 = arith.constant 0 : index
    %c0_13 = arith.constant 0 : index
    %33 = vector.load %arg3[%c0_12, %c0_13] : memref<16x128xf32, #tpu.memory_space<vmem>>, vector<16x128xf32>
    %cst_14 = arith.constant dense<0.000000e+00> : vector<16xf32>
    %34 = vector.multi_reduction <add>, %33, %cst_14 [1] : vector<16x128xf32> to vector<16xf32>
    %35 = vector.shape_cast %34 : vector<16xf32> to vector<16x1xf32>
    %36 = arith.mulf %33, %33 : vector<16x128xf32>
    %cst_15 = arith.constant dense<0.000000e+00> : vector<16xf32>
    %37 = vector.multi_reduction <add>, %36, %cst_15 [1] : vector<16x128xf32> to vector<16xf32>
    %38 = vector.shape_cast %37 : vector<16xf32> to vector<16x1xf32>
    %cst_16 = arith.constant 7.812500e-03 : f32
    %39 = vector.broadcast %cst_16 : f32 to vector<16x1xf32>
    %40 = arith.mulf %35, %39 : vector<16x1xf32>
    %41 = arith.mulf %35, %40 : vector<16x1xf32>
    %42 = arith.subf %38, %41 : vector<16x1xf32>
    %cst_17 = arith.constant 0.00787401571 : f32
    %43 = vector.broadcast %cst_17 : f32 to vector<16x1xf32>
    %44 = arith.mulf %42, %43 : vector<16x1xf32>
    %cst_18 = arith.constant 0.000000e+00 : f32
    %45 = vector.broadcast %cst_18 : f32 to vector<16x1xf32>
    %46 = arith.maximumf %44, %45 : vector<16x1xf32>
    %47 = math.sqrt %46 : vector<16x1xf32>
    %cst_19 = arith.constant 9.99999997E-7 : f32
    %48 = vector.broadcast %cst_19 : f32 to vector<16x1xf32>
    %49 = arith.addf %47, %48 : vector<16x1xf32>
    %50 = tpu.reciprocal %49 {approx = true} : vector<16x1xf32> -> vector<16x1xf32>
    %51 = arith.mulf %49, %50 : vector<16x1xf32>
    %cst_20 = arith.constant 2.000000e+00 : f32
    %52 = vector.broadcast %cst_20 : f32 to vector<16x1xf32>
    %53 = arith.subf %52, %51 : vector<16x1xf32>
    %54 = arith.mulf %50, %53 : vector<16x1xf32>
    %c2 = arith.constant 2 : index
    %c0_21 = arith.constant 0 : index
    %55 = vector.load %arg1[%c2, %c0_21] : memref<6x128xf32, #tpu.memory_space<vmem>>, vector<1x128xf32>
    %c3 = arith.constant 3 : index
    %c0_22 = arith.constant 0 : index
    %56 = vector.load %arg1[%c3, %c0_22] : memref<6x128xf32, #tpu.memory_space<vmem>>, vector<1x128xf32>
    %57 = vector.broadcast %40 : vector<16x1xf32> to vector<16x128xf32>
    %58 = arith.subf %33, %57 : vector<16x128xf32>
    %59 = vector.broadcast %54 : vector<16x1xf32> to vector<16x128xf32>
    %60 = arith.mulf %58, %59 : vector<16x128xf32>
    %61 = vector.broadcast %55 : vector<1x128xf32> to vector<16x128xf32>
    %62 = arith.mulf %60, %61 : vector<16x128xf32>
    %63 = vector.broadcast %56 : vector<1x128xf32> to vector<16x128xf32>
    %64 = arith.addf %62, %63 : vector<16x128xf32>
    %c0_23 = arith.constant 0 : index
    %c0_24 = arith.constant 0 : index
    %65 = vector.load %arg6[%c0_23, %c0_24] : memref<16x128xf32, #tpu.memory_space<vmem>>, vector<16x128xf32>
    tpu.vector_store %arg6[%c0_23, %c0_24], %64 {strides = array<i32>} : memref<16x128xf32, #tpu.memory_space<vmem>>, vector<16x128xf32>,
    %c0_25 = arith.constant 0 : index
    %c0_26 = arith.constant 0 : index
    %66 = vector.load %arg4[%c0_25, %c0_26] : memref<16x128xf32, #tpu.memory_space<vmem>>, vector<16x128xf32>
    %cst_27 = arith.constant dense<0.000000e+00> : vector<16xf32>
    %67 = vector.multi_reduction <add>, %66, %cst_27 [1] : vector<16x128xf32> to vector<16xf32>
    %68 = vector.shape_cast %67 : vector<16xf32> to vector<16x1xf32>
    %69 = arith.mulf %66, %66 : vector<16x128xf32>
    %cst_28 = arith.constant dense<0.000000e+00> : vector<16xf32>
    %70 = vector.multi_reduction <add>, %69, %cst_28 [1] : vector<16x128xf32> to vector<16xf32>
    %71 = vector.shape_cast %70 : vector<16xf32> to vector<16x1xf32>
    %cst_29 = arith.constant 7.812500e-03 : f32
    %72 = vector.broadcast %cst_29 : f32 to vector<16x1xf32>
    %73 = arith.mulf %68, %72 : vector<16x1xf32>
    %74 = arith.mulf %68, %73 : vector<16x1xf32>
    %75 = arith.subf %71, %74 : vector<16x1xf32>
    %cst_30 = arith.constant 0.00787401571 : f32
    %76 = vector.broadcast %cst_30 : f32 to vector<16x1xf32>
    %77 = arith.mulf %75, %76 : vector<16x1xf32>
    %cst_31 = arith.constant 0.000000e+00 : f32
    %78 = vector.broadcast %cst_31 : f32 to vector<16x1xf32>
    %79 = arith.maximumf %77, %78 : vector<16x1xf32>
    %80 = math.sqrt %79 : vector<16x1xf32>
    %cst_32 = arith.constant 9.99999997E-7 : f32
    %81 = vector.broadcast %cst_32 : f32 to vector<16x1xf32>
    %82 = arith.addf %80, %81 : vector<16x1xf32>
    %83 = tpu.reciprocal %82 {approx = true} : vector<16x1xf32> -> vector<16x1xf32>
    %84 = arith.mulf %82, %83 : vector<16x1xf32>
    %cst_33 = arith.constant 2.000000e+00 : f32
    %85 = vector.broadcast %cst_33 : f32 to vector<16x1xf32>
    %86 = arith.subf %85, %84 : vector<16x1xf32>
    %87 = arith.mulf %83, %86 : vector<16x1xf32>
    %c4 = arith.constant 4 : index
    %c0_34 = arith.constant 0 : index
    %88 = vector.load %arg1[%c4, %c0_34] : memref<6x128xf32, #tpu.memory_space<vmem>>, vector<1x128xf32>
    %c5 = arith.constant 5 : index
    %c0_35 = arith.constant 0 : index
    %89 = vector.load %arg1[%c5, %c0_35] : memref<6x128xf32, #tpu.memory_space<vmem>>, vector<1x128xf32>
    %90 = vector.broadcast %73 : vector<16x1xf32> to vector<16x128xf32>
    %91 = arith.subf %66, %90 : vector<16x128xf32>
    %92 = vector.broadcast %87 : vector<16x1xf32> to vector<16x128xf32>
    %93 = arith.mulf %91, %92 : vector<16x128xf32>
    %94 = vector.broadcast %88 : vector<1x128xf32> to vector<16x128xf32>
    %95 = arith.mulf %93, %94 : vector<16x128xf32>
    %96 = vector.broadcast %89 : vector<1x128xf32> to vector<16x128xf32>
    %97 = arith.addf %95, %96 : vector<16x128xf32>
    %c0_36 = arith.constant 0 : index
    %c0_37 = arith.constant 0 : index
    %98 = vector.load %arg7[%c0_36, %c0_37] : memref<16x128xf32, #tpu.memory_space<vmem>>, vector<16x128xf32>
    tpu.vector_store %arg7[%c0_36, %c0_37], %97 {strides = array<i32>} : memref<16x128xf32, #tpu.memory_space<vmem>>, vector<16x128xf32>,
    return
  }
  func.func @transform_0(%arg0: i32) -> (i32, i32) {
    %c0_i32 = arith.constant 0 : i32
    %c0_i32_0 = arith.constant 0 : i32
    %c0_i32_1 = arith.constant 0 : i32
    return %c0_i32, %c0_i32_0 : i32, i32
  }
  func.func @transform_1(%arg0: i32) -> (i32, i32) {
    %c0_i32 = arith.constant 0 : i32
    %c0_i32_0 = arith.constant 0 : i32
    return %arg0, %c0_i32 : i32, i32
  }
  func.func @transform_2(%arg0: i32) -> (i32, i32) {
    %c0_i32 = arith.constant 0 : i32
    %c0_i32_0 = arith.constant 0 : i32
    return %arg0, %c0_i32 : i32, i32
  }
  func.func @transform_3(%arg0: i32) -> (i32, i32) {
    %c0_i32 = arith.constant 0 : i32
    %c0_i32_0 = arith.constant 0 : i32
    return %arg0, %c0_i32 : i32, i32
  }
  func.func @transform_4(%arg0: i32) -> (i32, i32) {
    %c0_i32 = arith.constant 0 : i32
    %c0_i32_0 = arith.constant 0 : i32
    return %arg0, %c0_i32 : i32, i32
  }
  func.func @transform_5(%arg0: i32) -> (i32, i32) {
    %c0_i32 = arith.constant 0 : i32
    %c0_i32_0 = arith.constant 0 : i32
    return %arg0, %c0_i32 : i32, i32
  }
  func.func @transform_6(%arg0: i32) -> (i32, i32) {
    %c0_i32 = arith.constant 0 : i32
    %c0_i32_0 = arith.constant 0 : i32
    return %arg0, %c0_i32 : i32, i32
  }
}

</mosaic_0001>

<llo_original>
// kernel: tpu_custom_call.1
$region0: #{tpu_custom_call.1}
  #allocation0 [shape = 'u32[]', space=smem, size = 0x4, offset = 0x4, fixed_abs, tag = 'smem constant byte address 0x4 - core index']
  #allocation1 [shape = 'u32[144,128]{1,0:T(1,128)}', space=vmem, size = 0x12000, scoped, tag = 'internal scratch']
  %s0 = inlined_call_operand.hbm [shape: f32[2,128], index: 0, kind: input, shape index: {}]
  %s1 = inlined_call_operand.hbm [shape: f32[256,128], index: 1, kind: input, shape index: {}]
  %s2 = inlined_call_operand.hbm [shape: f32[256,128], index: 2, kind: output, shape index: {}]
  %s3 = sld [smem:[#allocation0]]
  $region26: #{tpu_custom_call.1} parent=0
    _
  %s5 = ssub.s32 1, %s3
  %s6 = scalar_select 0, %s5, %s3
  $region1: #{tpu_custom_call.1} parent=0
    #allocation2 [shape = 'u8[1024]{0}', space=vmem, size = 0x400, scoped, tag = 'input window, operand 0, single buffered']
    #allocation3 [shape = 's32[1]{0}', space=sflag, size = 0x4, scoped, tag = 'scoped memory for tpu_custom_call.1']
    #allocation4 [shape = 's32[1]{0}', space=sflag, size = 0x4, scoped, tag = 'scoped memory for tpu_custom_call.1']
    #allocation5 [shape = 'u8[131072]{0}', space=vmem, size = 0x20000, scoped, tag = 'input window, operand 1, single buffered']
    #allocation6 [shape = 's32[1]{0}', space=sflag, size = 0x4, scoped, tag = 'scoped memory for tpu_custom_call.1']
    #allocation7 [shape = 'u8[131072]{0}', space=vmem, size = 0x20000, scoped, tag = 'output window, operand 0, single buffered']
    %7 = vsyncpa [#allocation3], 0
    %8 = vsyncpa [#allocation6], 0
    %9 = vsyncpa [#allocation4], 0
    // Predicated region
    $region2: #{tpu_custom_call.1} parent=1 // pred_check
      _
    $region3: #{tpu_custom_call.1} parent=1 // pred_check_branch
      %11 = sbr.rel (0) target = $region5
    $region4: #{tpu_custom_call.1} parent=1 // pred_region
      %s13 = ssub.s32 32, 32
      %14 = vsyncadd [#allocation3], %s13
      %s16 = sshll.u32 [#allocation2], 4
      %s17 = int_to_ptr.vmem [resolvable:$true] %s16
      %19 = dma.hbm_to_vmem [thread:$0]  %s0, 32, %s17, [#allocation3]
    $region5: #{tpu_custom_call.1} parent=1 // pred_fallthru
      _
    // Predicated region
    $region6: #{tpu_custom_call.1} parent=1 // pred_check
      _
    $region7: #{tpu_custom_call.1} parent=1 // pred_check_branch
      %21 = sbr.rel (0) target = $region9
    $region8: #{tpu_custom_call.1} parent=1 // pred_region
      %s23 = ssub.s32 4096, 4096
      %24 = vsyncadd [#allocation6], %s23
      %s25 = sshll.u32 [#allocation5], 4
      %s26 = int_to_ptr.vmem [resolvable:$true] %s25
      %31 = dma.hbm_to_vmem [thread:$0]  %s1, 4096, %s26, [#allocation6], 128, 128, 8
    $region9: #{tpu_custom_call.1} parent=1 // pred_fallthru
      _
    // Predicated region
    $region10: #{tpu_custom_call.1} parent=1 // pred_check
      _
    $region11: #{tpu_custom_call.1} parent=1 // pred_check_branch
      %33 = sbr.rel (0) target = $region13
    $region12: #{tpu_custom_call.1} parent=1 // pred_region
      %34 = dma.done [#allocation3], 32
    $region13: #{tpu_custom_call.1} parent=1 // pred_fallthru
      _
    // Predicated region
    $region14: #{tpu_custom_call.1} parent=1 // pred_check
      _
    $region15: #{tpu_custom_call.1} parent=1 // pred_check_branch
      %36 = sbr.rel (0) target = $region17
    $region16: #{tpu_custom_call.1} parent=1 // pred_region
      %37 = dma.done [#allocation6], 4096
    $region17: #{tpu_custom_call.1} parent=1 // pred_fallthru
      _
    %v38 = vld [vmem:[#allocation5] sm:$0xff]
    %v39 = vld [vmem:[#allocation5 + $0x8] sm:$0xff]
    %v40 = vld [vmem:[#allocation5 + $0x10] sm:$0xff]
    %v41 = vld [vmem:[#allocation5 + $0x18] sm:$0xff]
    %v42 = vld [vmem:[#allocation5 + $0x20] sm:$0xff]
    %v43 = vld [vmem:[#allocation5 + $0x28] sm:$0xff]
    %v44 = vld [vmem:[#allocation5 + $0x30] sm:$0xff]
    %v45 = vld [vmem:[#allocation5 + $0x38] sm:$0xff]
    %v46 = vld [vmem:[#allocation5 + $0x40] sm:$0xff]
    %v47 = vld [vmem:[#allocation5 + $0x48] sm:$0xff]
    %v48 = vld [vmem:[#allocation5 + $0x50] sm:$0xff]
    %v49 = vld [vmem:[#allocation5 + $0x58] sm:$0xff]
    %v50 = vld [vmem:[#allocation5 + $0x60] sm:$0xff]
    %v51 = vld [vmem:[#allocation5 + $0x68] sm:$0xff]
    %v52 = vld [vmem:[#allocation5 + $0x70] sm:$0xff]
    %v53 = vld [vmem:[#allocation5 + $0x78] sm:$0xff]
    %v54 = vld [vmem:[#allocation5 + $0x80] sm:$0xff]
    %v55 = vld [vmem:[#allocation5 + $0x88] sm:$0xff]
    %v56 = vld [vmem:[#allocation5 + $0x90] sm:$0xff]
    %v57 = vld [vmem:[#allocation5 + $0x98] sm:$0xff]
    %v58 = vld [vmem:[#allocation5 + $0xa0] sm:$0xff]
    %v59 = vld [vmem:[#allocation5 + $0xa8] sm:$0xff]
    %v60 = vld [vmem:[#allocation5 + $0xb0] sm:$0xff]
    %v61 = vld [vmem:[#allocation5 + $0xb8] sm:$0xff]
    %v62 = vld [vmem:[#allocation5 + $0xc0] sm:$0xff]
    %v63 = vld [vmem:[#allocation5 + $0xc8] sm:$0xff]
    %v64 = vld [vmem:[#allocation5 + $0xd0] sm:$0xff]
    %v65 = vld [vmem:[#allocation5 + $0xd8] sm:$0xff]
    %v66 = vld [vmem:[#allocation5 + $0xe0] sm:$0xff]
    %v67 = vld [vmem:[#allocation5 + $0xe8] sm:$0xff]
    %v68 = vld [vmem:[#allocation5 + $0xf0] sm:$0xff]
    %v69 = vld [vmem:[#allocation5 + $0xf8] sm:$0xff]
    %70 = vmatprep.subr.mxu0 0.0
    %71 = vmatpush1.msra.mxu0 1.0
    %72 = vmatprep.subr.mxu0 0.0
    %73 = vmatpush1.msra.mxu0 1.0
    %74 = vmatprep.subr.mxu0 0.0
    %75 = vmatpush1.msra.mxu0 1.0
    %76 = vmatprep.subr.mxu0 0.0
    %77 = vmatpush1.msra.mxu0 1.0
    %78 = vmatprep.subr.mxu0 0.0
    %79 = vmatpush1.msra.mxu0 1.0
    %80 = vmatprep.subr.mxu0 0.0
    %81 = vmatpush1.msra.mxu0 1.0
    %82 = vmatprep.subr.mxu0 0.0
    %83 = vmatpush1.msra.mxu0 1.0
    %84 = vmatprep.subr.mxu0 0.0
    %85 = vmatpush1.msra.mxu0 1.0
    %86 = vmatprep.subr.mxu0 0.0
    %87 = vmatpush1.msra.mxu0 1.0
    %88 = vmatprep.subr.mxu0 0.0
    %89 = vmatpush1.msra.mxu0 1.0
    %90 = vmatprep.subr.mxu0 0.0
    %91 = vmatpush1.msra.mxu0 1.0
    %92 = vmatprep.subr.mxu0 0.0
    %93 = vmatpush1.msra.mxu0 1.0
    %94 = vmatprep.subr.mxu0 0.0
    %95 = vmatpush1.msra.mxu0 1.0
    %96 = vmatprep.subr.mxu0 0.0
    %97 = vmatpush1.msra.mxu0 1.0
    %98 = vmatprep.subr.mxu0 0.0
    %99 = vmatpush1.msra.mxu0 1.0
    %100 = vmatprep.subr.mxu0 0.0
    %101 = vmatpush1.msra.mxu0 1.0
    %102 = vmatprep.subr.mxu0 0.0
    %103 = vmatpush1.msra.mxu0 0.0
    %104 = vmatprep.subr.mxu0 0.0
    %105 = vmatpush1.msra.mxu0 0.0
    %106 = vmatprep.subr.mxu0 0.0
    %107 = vmatpush1.msra.mxu0 0.0
    %108 = vmatprep.subr.mxu0 0.0
    %109 = vmatpush1.msra.mxu0 0.0
    %110 = vmatprep.subr.mxu0 0.0
    %111 = vmatpush1.msra.mxu0 0.0
    %112 = vmatprep.subr.mxu0 0.0
    %113 = vmatpush1.msra.mxu0 0.0
    %114 = vmatprep.subr.mxu0 0.0
    %115 = vmatpush1.msra.mxu0 0.0
    %116 = vmatprep.subr.mxu0 0.0
    %117 = vmatpush1.msra.mxu0 0.0
    %118 = vmatprep.subr.mxu0 0.0
    %119 = vmatpush1.msra.mxu0 0.0
    %120 = vmatprep.subr.mxu0 0.0
    %121 = vmatpush1.msra.mxu0 0.0
    %122 = vmatprep.subr.mxu0 0.0
    %123 = vmatpush1.msra.mxu0 0.0
    %124 = vmatprep.subr.mxu0 0.0
    %125 = vmatpush1.msra.mxu0 0.0
    %126 = vmatprep.subr.mxu0 0.0
    %127 = vmatpush1.msra.mxu0 0.0
    %128 = vmatprep.subr.mxu0 0.0
    %129 = vmatpush1.msra.mxu0 0.0
    %130 = vmatprep.subr.mxu0 0.0
    %131 = vmatpush1.msra.mxu0 0.0
    %132 = vmatprep.subr.mxu0 0.0
    %133 = vmatpush1.msra.mxu0 0.0
    %134 = vmatprep.mubr.f32.mxu0 0.0
    %135 = vmatmul.mubr.f32.gmra.mrb[0].mxu0 %v38
    %v136 = vpop.f32.mrb[0].mxu0
    %v137 = vadd.f32 0.0, %v136
    %v138 = vpop.f32.mrb[0].mxu0
    %139 = vmatprep.mubr.f32.mxu0 0.0
    %140 = vmatmul.mubr.f32.gmra.mrb[0].mxu0 %v39
    %v141 = vpop.f32.mrb[0].mxu0
    %v142 = vadd.f32 0.0, %v141
    %v143 = vpop.f32.mrb[0].mxu0
    %144 = vmatprep.mubr.f32.mxu0 0.0
    %145 = vmatmul.mubr.f32.gmra.mrb[0].mxu0 %v40
    %v146 = vpop.f32.mrb[0].mxu0
    %v147 = vadd.f32 0.0, %v146
    %v148 = vpop.f32.mrb[0].mxu0
    %149 = vmatprep.mubr.f32.mxu0 0.0
    %150 = vmatmul.mubr.f32.gmra.mrb[0].mxu0 %v41
    %v151 = vpop.f32.mrb[0].mxu0
    %v152 = vadd.f32 0.0, %v151
    %v153 = vpop.f32.mrb[0].mxu0
    %154 = vmatprep.mubr.f32.mxu0 0.0
    %155 = vmatmul.mubr.f32.gmra.mrb[0].mxu0 %v42
    %v156 = vpop.f32.mrb[0].mxu0
    %v157 = vadd.f32 0.0, %v156
    %v158 = vpop.f32.mrb[0].mxu0
    %159 = vmatprep.mubr.f32.mxu0 0.0
    %160 = vmatmul.mubr.f32.gmra.mrb[0].mxu0 %v43
    %v161 = vpop.f32.mrb[0].mxu0
    %v162 = vadd.f32 0.0, %v161
    %v163 = vpop.f32.mrb[0].mxu0
    %164 = vmatprep.mubr.f32.mxu0 0.0
    %165 = vmatmul.mubr.f32.gmra.mrb[0].mxu0 %v44
    %v166 = vpop.f32.mrb[0].mxu0
    %v167 = vadd.f32 0.0, %v166
    %v168 = vpop.f32.mrb[0].mxu0
    %169 = vmatprep.mubr.f32.mxu0 0.0
    %170 = vmatmul.mubr.f32.gmra.mrb[0].mxu0 %v45
    %v171 = vpop.f32.mrb[0].mxu0
    %v172 = vadd.f32 0.0, %v171
    %v173 = vpop.f32.mrb[0].mxu0
    %174 = vmatprep.mubr.f32.mxu0 0.0
    %175 = vmatmul.mubr.f32.gmra.mrb[0].mxu0 %v46
    %v176 = vpop.f32.mrb[0].mxu0
    %v177 = vadd.f32 0.0, %v176
    %v178 = vpop.f32.mrb[0].mxu0
    %179 = vmatprep.mubr.f32.mxu0 0.0
    %180 = vmatmul.mubr.f32.gmra.mrb[0].mxu0 %v47
    %v181 = vpop.f32.mrb[0].mxu0
    %v182 = vadd.f32 0.0, %v181
    %v183 = vpop.f32.mrb[0].mxu0
    %184 = vmatprep.mubr.f32.mxu0 0.0
    %185 = vmatmul.mubr.f32.gmra.mrb[0].mxu0 %v48
    %v186 = vpop.f32.mrb[0].mxu0
    %v187 = vadd.f32 0.0, %v186
    %v188 = vpop.f32.mrb[0].mxu0
    %189 = vmatprep.mubr.f32.mxu0 0.0
    %190 = vmatmul.mubr.f32.gmra.mrb[0].mxu0 %v49
    %v191 = vpop.f32.mrb[0].mxu0
    %v192 = vadd.f32 0.0, %v191
    %v193 = vpop.f32.mrb[0].mxu0
    %194 = vmatprep.mubr.f32.mxu0 0.0
    %195 = vmatmul.mubr.f32.gmra.mrb[0].mxu0 %v50
    %v196 = vpop.f32.mrb[0].mxu0
    %v197 = vadd.f32 0.0, %v196
    %v198 = vpop.f32.mrb[0].mxu0
    %199 = vmatprep.mubr.f32.mxu0 0.0
    %200 = vmatmul.mubr.f32.gmra.mrb[0].mxu0 %v51
    %v201 = vpop.f32.mrb[0].mxu0
    %v202 = vadd.f32 0.0, %v201
    %v203 = vpop.f32.mrb[0].mxu0
    %204 = vmatprep.mubr.f32.mxu0 0.0
    %205 = vmatmul.mubr.f32.gmra.mrb[0].mxu0 %v52
    %v206 = vpop.f32.mrb[0].mxu0
    %v207 = vadd.f32 0.0, %v206
    %v208 = vpop.f32.mrb[0].mxu0
    %209 = vmatprep.mubr.f32.mxu0 0.0
    %210 = vmatmul.mubr.f32.gmra.mrb[0].mxu0 %v53
    %v211 = vpop.f32.mrb[0].mxu0
    %v212 = vadd.f32 0.0, %v211
    %v213 = vpop.f32.mrb[0].mxu0
    %214 = vmatprep.mubr.f32.mxu0 0.0
    %215 = vmatmul.mubr.f32.gmra.mrb[0].mxu0 %v54
    %v216 = vpop.f32.mrb[0].mxu0
    %v217 = vadd.f32 0.0, %v216
    %v218 = vpop.f32.mrb[0].mxu0
    %219 = vmatprep.mubr.f32.mxu0 0.0
    %220 = vmatmul.mubr.f32.gmra.mrb[0].mxu0 %v55
    %v221 = vpop.f32.mrb[0].mxu0
    %v222 = vadd.f32 0.0, %v221
    %v223 = vpop.f32.mrb[0].mxu0
    %224 = vmatprep.mubr.f32.mxu0 0.0
    %225 = vmatmul.mubr.f32.gmra.mrb[0].mxu0 %v56
    %v226 = vpop.f32.mrb[0].mxu0
    %v227 = vadd.f32 0.0, %v226
    %v228 = vpop.f32.mrb[0].mxu0
    %229 = vmatprep.mubr.f32.mxu0 0.0
    %230 = vmatmul.mubr.f32.gmra.mrb[0].mxu0 %v57
    %v231 = vpop.f32.mrb[0].mxu0
    %v232 = vadd.f32 0.0, %v231
    %v233 = vpop.f32.mrb[0].mxu0
    %234 = vmatprep.mubr.f32.mxu0 0.0
    %235 = vmatmul.mubr.f32.gmra.mrb[0].mxu0 %v58
    %v236 = vpop.f32.mrb[0].mxu0
    %v237 = vadd.f32 0.0, %v236
    %v238 = vpop.f32.mrb[0].mxu0
    %239 = vmatprep.mubr.f32.mxu0 0.0
    %240 = vmatmul.mubr.f32.gmra.mrb[0].mxu0 %v59
    %v241 = vpop.f32.mrb[0].mxu0
    %v242 = vadd.f32 0.0, %v241
    %v243 = vpop.f32.mrb[0].mxu0
    %244 = vmatprep.mubr.f32.mxu0 0.0
    %245 = vmatmul.mubr.f32.gmra.mrb[0].mxu0 %v60
    %v246 = vpop.f32.mrb[0].mxu0
    %v247 = vadd.f32 0.0, %v246
    %v248 = vpop.f32.mrb[0].mxu0
    %249 = vmatprep.mubr.f32.mxu0 0.0
    %250 = vmatmul.mubr.f32.gmra.mrb[0].mxu0 %v61
    %v251 = vpop.f32.mrb[0].mxu0
    %v252 = vadd.f32 0.0, %v251
    %v253 = vpop.f32.mrb[0].mxu0
    %254 = vmatprep.mubr.f32.mxu0 0.0
    %255 = vmatmul.mubr.f32.gmra.mrb[0].mxu0 %v62
    %v256 = vpop.f32.mrb[0].mxu0
    %v257 = vadd.f32 0.0, %v256
    %v258 = vpop.f32.mrb[0].mxu0
    %259 = vmatprep.mubr.f32.mxu0 0.0
    %260 = vmatmul.mubr.f32.gmra.mrb[0].mxu0 %v63
    %v261 = vpop.f32.mrb[0].mxu0
    %v262 = vadd.f32 0.0, %v261
    %v263 = vpop.f32.mrb[0].mxu0
    %264 = vmatprep.mubr.f32.mxu0 0.0
    %265 = vmatmul.mubr.f32.gmra.mrb[0].mxu0 %v64
    %v266 = vpop.f32.mrb[0].mxu0
    %v267 = vadd.f32 0.0, %v266
    %v268 = vpop.f32.mrb[0].mxu0
    %269 = vmatprep.mubr.f32.mxu0 0.0
    %270 = vmatmul.mubr.f32.gmra.mrb[0].mxu0 %v65
    %v271 = vpop.f32.mrb[0].mxu0
    %v272 = vadd.f32 0.0, %v271
    %v273 = vpop.f32.mrb[0].mxu0
    %274 = vmatprep.mubr.f32.mxu0 0.0
    %275 = vmatmul.mubr.f32.gmra.mrb[0].mxu0 %v66
    %v276 = vpop.f32.mrb[0].mxu0
    %v277 = vadd.f32 0.0, %v276
    %v278 = vpop.f32.mrb[0].mxu0
    %279 = vmatprep.mubr.f32.mxu0 0.0
    %280 = vmatmul.mubr.f32.gmra.mrb[0].mxu0 %v67
    %v281 = vpop.f32.mrb[0].mxu0
    %v282 = vadd.f32 0.0, %v281
    %v283 = vpop.f32.mrb[0].mxu0
    %284 = vmatprep.mubr.f32.mxu0 0.0
    %285 = vmatmul.mubr.f32.gmra.mrb[0].mxu0 %v68
    %v286 = vpop.f32.mrb[0].mxu0
    %v287 = vadd.f32 0.0, %v286
    %v288 = vpop.f32.mrb[0].mxu0
    %289 = vmatprep.mubr.f32.mxu0 0.0
    %290 = vmatmul.mubr.f32.gmra.mrb[0].mxu0 %v69
    %v291 = vpop.f32.mrb[0].mxu0
    %v292 = vadd.f32 0.0, %v291
    %v293 = vpop.f32.mrb[0].mxu0
    %294 = vdwg.mxu0
    %v295 = vmul.f32 %v38, %v38
    %v296 = vmul.f32 %v39, %v39
    %v297 = vmul.f32 %v40, %v40
    %v298 = vmul.f32 %v41, %v41
    %v299 = vmul.f32 %v42, %v42
    %v300 = vmul.f32 %v43, %v43
    %v301 = vmul.f32 %v44, %v44
    %v302 = vmul.f32 %v45, %v45
    %v303 = vmul.f32 %v46, %v46
    %v304 = vmul.f32 %v47, %v47
    %v305 = vmul.f32 %v48, %v48
    %v306 = vmul.f32 %v49, %v49
    %v307 = vmul.f32 %v50, %v50
    %v308 = vmul.f32 %v51, %v51
    %v309 = vmul.f32 %v52, %v52
    %v310 = vmul.f32 %v53, %v53
    %v311 = vmul.f32 %v54, %v54
    %v312 = vmul.f32 %v55, %v55
    %v313 = vmul.f32 %v56, %v56
    %v314 = vmul.f32 %v57, %v57
    %v315 = vmul.f32 %v58, %v58
    %v316 = vmul.f32 %v59, %v59
    %v317 = vmul.f32 %v60, %v60
    %v318 = vmul.f32 %v61, %v61
    %v319 = vmul.f32 %v62, %v62
    %v320 = vmul.f32 %v63, %v63
    %v321 = vmul.f32 %v64, %v64
    %v322 = vmul.f32 %v65, %v65
    %v323 = vmul.f32 %v66, %v66
    %v324 = vmul.f32 %v67, %v67
    %v325 = vmul.f32 %v68, %v68
    %v326 = vmul.f32 %v69, %v69
    %327 = vmatprep.subr.mxu0 0.0
    %328 = vmatpush1.msra.mxu0 1.0
    %329 = vmatprep.subr.mxu0 0.0
    %330 = vmatpush1.msra.mxu0 1.0
    %331 = vmatprep.subr.mxu0 0.0
    %332 = vmatpush1.msra.mxu0 1.0
    %333 = vmatprep.subr.mxu0 0.0
    %334 = vmatpush1.msra.mxu0 1.0
    %335 = vmatprep.subr.mxu0 0.0
    %336 = vmatpush1.msra.mxu0 1.0
    %337 = vmatprep.subr.mxu0 0.0
    %338 = vmatpush1.msra.mxu0 1.0
    %339 = vmatprep.subr.mxu0 0.0
    %340 = vmatpush1.msra.mxu0 1.0
    %341 = vmatprep.subr.mxu0 0.0
    %342 = vmatpush1.msra.mxu0 1.0
    %343 = vmatprep.subr.mxu0 0.0
    %344 = vmatpush1.msra.mxu0 1.0
    %345 = vmatprep.subr.mxu0 0.0
    %346 = vmatpush1.msra.mxu0 1.0
    %347 = vmatprep.subr.mxu0 0.0
    %348 = vmatpush1.msra.mxu0 1.0
    %349 = vmatprep.subr.mxu0 0.0
    %350 = vmatpush1.msra.mxu0 1.0
    %351 = vmatprep.subr.mxu0 0.0
    %352 = vmatpush1.msra.mxu0 1.0
    %353 = vmatprep.subr.mxu0 0.0
    %354 = vmatpush1.msra.mxu0 1.0
    %355 = vmatprep.subr.mxu0 0.0
    %356 = vmatpush1.msra.mxu0 1.0
    %357 = vmatprep.subr.mxu0 0.0
    %358 = vmatpush1.msra.mxu0 1.0
    %359 = vmatprep.subr.mxu0 0.0
    %360 = vmatpush1.msra.mxu0 0.0
    %361 = vmatprep.subr.mxu0 0.0
    %362 = vmatpush1.msra.mxu0 0.0
    %363 = vmatprep.subr.mxu0 0.0
    %364 = vmatpush1.msra.mxu0 0.0
    %365 = vmatprep.subr.mxu0 0.0
    %366 = vmatpush1.msra.mxu0 0.0
    %367 = vmatprep.subr.mxu0 0.0
    %368 = vmatpush1.msra.mxu0 0.0
    %369 = vmatprep.subr.mxu0 0.0
    %370 = vmatpush1.msra.mxu0 0.0
    %371 = vmatprep.subr.mxu0 0.0
    %372 = vmatpush1.msra.mxu0 0.0
    %373 = vmatprep.subr.mxu0 0.0
    %374 = vmatpush1.msra.mxu0 0.0
    %375 = vmatprep.subr.mxu0 0.0
    %376 = vmatpush1.msra.mxu0 0.0
    %377 = vmatprep.subr.mxu0 0.0
    %378 = vmatpush1.msra.mxu0 0.0
    %379 = vmatprep.subr.mxu0 0.0
    %380 = vmatpush1.msra.mxu0 0.0
    %381 = vmatprep.subr.mxu0 0.0
    %382 = vmatpush1.msra.mxu0 0.0
    %383 = vmatprep.subr.mxu0 0.0
    %384 = vmatpush1.msra.mxu0 0.0
    %385 = vmatprep.subr.mxu0 0.0
    %386 = vmatpush1.msra.mxu0 0.0
    %387 = vmatprep.subr.mxu0 0.0
    %388 = vmatpush1.msra.mxu0 0.0
    %389 = vmatprep.subr.mxu0 0.0
    %390 = vmatpush1.msra.mxu0 0.0
    %391 = vmatprep.mubr.f32.mxu0 0.0
    %392 = vmatmul.mubr.f32.gmra.mrb[0].mxu0 %v295
    %v393 = vpop.f32.mrb[0].mxu0
    %v394 = vadd.f32 0.0, %v393
    %v395 = vpop.f32.mrb[0].mxu0
    %396 = vmatprep.mubr.f32.mxu0 0.0
    %397 = vmatmul.mubr.f32.gmra.mrb[0].mxu0 %v296
    %v398 = vpop.f32.mrb[0].mxu0
    %v399 = vadd.f32 0.0, %v398
    %v400 = vpop.f32.mrb[0].mxu0
    %401 = vmatprep.mubr.f32.mxu0 0.0
    %402 = vmatmul.mubr.f32.gmra.mrb[0].mxu0 %v297
    %v403 = vpop.f32.mrb[0].mxu0
    %v404 = vadd.f32 0.0, %v403
    %v405 = vpop.f32.mrb[0].mxu0
    %406 = vmatprep.mubr.f32.mxu0 0.0
    %407 = vmatmul.mubr.f32.gmra.mrb[0].mxu0 %v298
    %v408 = vpop.f32.mrb[0].mxu0
    %v409 = vadd.f32 0.0, %v408
    %v410 = vpop.f32.mrb[0].mxu0
    %411 = vmatprep.mubr.f32.mxu0 0.0
    %412 = vmatmul.mubr.f32.gmra.mrb[0].mxu0 %v299
    %v413 = vpop.f32.mrb[0].mxu0
    %v414 = vadd.f32 0.0, %v413
    %v415 = vpop.f32.mrb[0].mxu0
    %416 = vmatprep.mubr.f32.mxu0 0.0
    %417 = vmatmul.mubr.f32.gmra.mrb[0].mxu0 %v300
    %v418 = vpop.f32.mrb[0].mxu0
    %v419 = vadd.f32 0.0, %v418
    %v420 = vpop.f32.mrb[0].mxu0
    %421 = vmatprep.mubr.f32.mxu0 0.0
    %422 = vmatmul.mubr.f32.gmra.mrb[0].mxu0 %v301
    %v423 = vpop.f32.mrb[0].mxu0
    %v424 = vadd.f32 0.0, %v423
    %v425 = vpop.f32.mrb[0].mxu0
    %426 = vmatprep.mubr.f32.mxu0 0.0
    %427 = vmatmul.mubr.f32.gmra.mrb[0].mxu0 %v302
    %v428 = vpop.f32.mrb[0].mxu0
    %v429 = vadd.f32 0.0, %v428
    %v430 = vpop.f32.mrb[0].mxu0
    %431 = vmatprep.mubr.f32.mxu0 0.0
    %432 = vmatmul.mubr.f32.gmra.mrb[0].mxu0 %v303
    %v433 = vpop.f32.mrb[0].mxu0
    %v434 = vadd.f32 0.0, %v433
    %v435 = vpop.f32.mrb[0].mxu0
    %436 = vmatprep.mubr.f32.mxu0 0.0
    %437 = vmatmul.mubr.f32.gmra.mrb[0].mxu0 %v304
    %v438 = vpop.f32.mrb[0].mxu0
    %v439 = vadd.f32 0.0, %v438
    %v440 = vpop.f32.mrb[0].mxu0
    %441 = vmatprep.mubr.f32.mxu0 0.0
    %442 = vmatmul.mubr.f32.gmra.mrb[0].mxu0 %v305
    %v443 = vpop.f32.mrb[0].mxu0
    %v444 = vadd.f32 0.0, %v443
    %v445 = vpop.f32.mrb[0].mxu0
    %446 = vmatprep.mubr.f32.mxu0 0.0
    %447 = vmatmul.mubr.f32.gmra.mrb[0].mxu0 %v306
    %v448 = vpop.f32.mrb[0].mxu0
    %v449 = vadd.f32 0.0, %v448
    %v450 = vpop.f32.mrb[0].mxu0
    %451 = vmatprep.mubr.f32.mxu0 0.0
    %452 = vmatmul.mubr.f32.gmra.mrb[0].mxu0 %v307
    %v453 = vpop.f32.mrb[0].mxu0
    %v454 = vadd.f32 0.0, %v453
    %v455 = vpop.f32.mrb[0].mxu0
    %456 = vmatprep.mubr.f32.mxu0 0.0
    %457 = vmatmul.mubr.f32.gmra.mrb[0].mxu0 %v308
    %v458 = vpop.f32.mrb[0].mxu0
    %v459 = vadd.f32 0.0, %v458
    %v460 = vpop.f32.mrb[0].mxu0
    %461 = vmatprep.mubr.f32.mxu0 0.0
    %462 = vmatmul.mubr.f32.gmra.mrb[0].mxu0 %v309
    %v463 = vpop.f32.mrb[0].mxu0
    %v464 = vadd.f32 0.0, %v463
    %v465 = vpop.f32.mrb[0].mxu0
    %466 = vmatprep.mubr.f32.mxu0 0.0
    %467 = vmatmul.mubr.f32.gmra.mrb[0].mxu0 %v310
    %v468 = vpop.f32.mrb[0].mxu0
    %v469 = vadd.f32 0.0, %v468
    %v470 = vpop.f32.mrb[0].mxu0
    %471 = vmatprep.mubr.f32.mxu0 0.0
    %472 = vmatmul.mubr.f32.gmra.mrb[0].mxu0 %v311
    %v473 = vpop.f32.mrb[0].mxu0
    %v474 = vadd.f32 0.0, %v473
    %v475 = vpop.f32.mrb[0].mxu0
    %476 = vmatprep.mubr.f32.mxu0 0.0
    %477 = vmatmul.mubr.f32.gmra.mrb[0].mxu0 %v312
    %v478 = vpop.f32.mrb[0].mxu0
    %v479 = vadd.f32 0.0, %v478
    %v480 = vpop.f32.mrb[0].mxu0
    %481 = vmatprep.mubr.f32.mxu0 0.0
    %482 = vmatmul.mubr.f32.gmra.mrb[0].mxu0 %v313
    %v483 = vpop.f32.mrb[0].mxu0
    %v484 = vadd.f32 0.0, %v483
    %v485 = vpop.f32.mrb[0].mxu0
    %486 = vmatprep.mubr.f32.mxu0 0.0
    %487 = vmatmul.mubr.f32.gmra.mrb[0].mxu0 %v314
    %v488 = vpop.f32.mrb[0].mxu0
    %v489 = vadd.f32 0.0, %v488
    %v490 = vpop.f32.mrb[0].mxu0
    %491 = vmatprep.mubr.f32.mxu0 0.0
    %492 = vmatmul.mubr.f32.gmra.mrb[0].mxu0 %v315
    %v493 = vpop.f32.mrb[0].mxu0
    %v494 = vadd.f32 0.0, %v493
    %v495 = vpop.f32.mrb[0].mxu0
    %496 = vmatprep.mubr.f32.mxu0 0.0
    %497 = vmatmul.mubr.f32.gmra.mrb[0].mxu0 %v316
    %v498 = vpop.f32.mrb[0].mxu0
    %v499 = vadd.f32 0.0, %v498
    %v500 = vpop.f32.mrb[0].mxu0
    %501 = vmatprep.mubr.f32.mxu0 0.0
    %502 = vmatmul.mubr.f32.gmra.mrb[0].mxu0 %v317
    %v503 = vpop.f32.mrb[0].mxu0
    %v504 = vadd.f32 0.0, %v503
    %v505 = vpop.f32.mrb[0].mxu0
    %506 = vmatprep.mubr.f32.mxu0 0.0
    %507 = vmatmul.mubr.f32.gmra.mrb[0].mxu0 %v318
    %v508 = vpop.f32.mrb[0].mxu0
    %v509 = vadd.f32 0.0, %v508
    %v510 = vpop.f32.mrb[0].mxu0
    %511 = vmatprep.mubr.f32.mxu0 0.0
    %512 = vmatmul.mubr.f32.gmra.mrb[0].mxu0 %v319
    %v513 = vpop.f32.mrb[0].mxu0
    %v514 = vadd.f32 0.0, %v513
    %v515 = vpop.f32.mrb[0].mxu0
    %516 = vmatprep.mubr.f32.mxu0 0.0
    %517 = vmatmul.mubr.f32.gmra.mrb[0].mxu0 %v320
    %v518 = vpop.f32.mrb[0].mxu0
    %v519 = vadd.f32 0.0, %v518
    %v520 = vpop.f32.mrb[0].mxu0
    %521 = vmatprep.mubr.f32.mxu0 0.0
    %522 = vmatmul.mubr.f32.gmra.mrb[0].mxu0 %v321
    %v523 = vpop.f32.mrb[0].mxu0
    %v524 = vadd.f32 0.0, %v523
    %v525 = vpop.f32.mrb[0].mxu0
    %526 = vmatprep.mubr.f32.mxu0 0.0
    %527 = vmatmul.mubr.f32.gmra.mrb[0].mxu0 %v322
    %v528 = vpop.f32.mrb[0].mxu0
    %v529 = vadd.f32 0.0, %v528
    %v530 = vpop.f32.mrb[0].mxu0
    %531 = vmatprep.mubr.f32.mxu0 0.0
    %532 = vmatmul.mubr.f32.gmra.mrb[0].mxu0 %v323
    %v533 = vpop.f32.mrb[0].mxu0
    %v534 = vadd.f32 0.0, %v533
    %v535 = vpop.f32.mrb[0].mxu0
    %536 = vmatprep.mubr.f32.mxu0 0.0
    %537 = vmatmul.mubr.f32.gmra.mrb[0].mxu0 %v324
    %v538 = vpop.f32.mrb[0].mxu0
    %v539 = vadd.f32 0.0, %v538
    %v540 = vpop.f32.mrb[0].mxu0
    %541 = vmatprep.mubr.f32.mxu0 0.0
    %542 = vmatmul.mubr.f32.gmra.mrb[0].mxu0 %v325
    %v543 = vpop.f32.mrb[0].mxu0
    %v544 = vadd.f32 0.0, %v543
    %v545 = vpop.f32.mrb[0].mxu0
    %546 = vmatprep.mubr.f32.mxu0 0.0
    %547 = vmatmul.mubr.f32.gmra.mrb[0].mxu0 %v326
    %v548 = vpop.f32.mrb[0].mxu0
    %v549 = vadd.f32 0.0, %v548
    %v550 = vpop.f32.mrb[0].mxu0
    %551 = vdwg.mxu0
    %v552 = vmul.f32 %v137, 0.0078125
    %v553 = vmul.f32 %v142, 0.0078125
    %v554 = vmul.f32 %v147, 0.0078125
    %v555 = vmul.f32 %v152, 0.0078125
    %v556 = vmul.f32 %v157, 0.0078125
    %v557 = vmul.f32 %v162, 0.0078125
    %v558 = vmul.f32 %v167, 0.0078125
    %v559 = vmul.f32 %v172, 0.0078125
    %v560 = vmul.f32 %v177, 0.0078125
    %v561 = vmul.f32 %v182, 0.0078125
    %v562 = vmul.f32 %v187, 0.0078125
    %v563 = vmul.f32 %v192, 0.0078125
    %v564 = vmul.f32 %v197, 0.0078125
    %v565 = vmul.f32 %v202, 0.0078125
    %v566 = vmul.f32 %v207, 0.0078125
    %v567 = vmul.f32 %v212, 0.0078125
    %v568 = vmul.f32 %v217, 0.0078125
    %v569 = vmul.f32 %v222, 0.0078125
    %v570 = vmul.f32 %v227, 0.0078125
    %v571 = vmul.f32 %v232, 0.0078125
    %v572 = vmul.f32 %v237, 0.0078125
    %v573 = vmul.f32 %v242, 0.0078125
    %v574 = vmul.f32 %v247, 0.0078125
    %v575 = vmul.f32 %v252, 0.0078125
    %v576 = vmul.f32 %v257, 0.0078125
    %v577 = vmul.f32 %v262, 0.0078125
    %v578 = vmul.f32 %v267, 0.0078125
    %v579 = vmul.f32 %v272, 0.0078125
    %v580 = vmul.f32 %v277, 0.0078125
    %v581 = vmul.f32 %v282, 0.0078125
    %v582 = vmul.f32 %v287, 0.0078125
    %v583 = vmul.f32 %v292, 0.0078125
    %v584 = vmul.f32 %v137, %v552
    %v585 = vmul.f32 %v142, %v553
    %v586 = vmul.f32 %v147, %v554
    %v587 = vmul.f32 %v152, %v555
    %v588 = vmul.f32 %v157, %v556
    %v589 = vmul.f32 %v162, %v557
    %v590 = vmul.f32 %v167, %v558
    %v591 = vmul.f32 %v172, %v559
    %v592 = vmul.f32 %v177, %v560
    %v593 = vmul.f32 %v182, %v561
    %v594 = vmul.f32 %v187, %v562
    %v595 = vmul.f32 %v192, %v563
    %v596 = vmul.f32 %v197, %v564
    %v597 = vmul.f32 %v202, %v565
    %v598 = vmul.f32 %v207, %v566
    %v599 = vmul.f32 %v212, %v567
    %v600 = vmul.f32 %v217, %v568
    %v601 = vmul.f32 %v222, %v569
    %v602 = vmul.f32 %v227, %v570
    %v603 = vmul.f32 %v232, %v571
    %v604 = vmul.f32 %v237, %v572
    %v605 = vmul.f32 %v242, %v573
    %v606 = vmul.f32 %v247, %v574
    %v607 = vmul.f32 %v252, %v575
    %v608 = vmul.f32 %v257, %v576
    %v609 = vmul.f32 %v262, %v577
    %v610 = vmul.f32 %v267, %v578
    %v611 = vmul.f32 %v272, %v579
    %v612 = vmul.f32 %v277, %v580
    %v613 = vmul.f32 %v282, %v581
    %v614 = vmul.f32 %v287, %v582
    %v615 = vmul.f32 %v292, %v583
    %v616 = vsub.f32 %v394, %v584
    %v617 = vsub.f32 %v399, %v585
    %v618 = vsub.f32 %v404, %v586
    %v619 = vsub.f32 %v409, %v587
    %v620 = vsub.f32 %v414, %v588
    %v621 = vsub.f32 %v419, %v589
    %v622 = vsub.f32 %v424, %v590
    %v623 = vsub.f32 %v429, %v591
    %v624 = vsub.f32 %v434, %v592
    %v625 = vsub.f32 %v439, %v593
    %v626 = vsub.f32 %v444, %v594
    %v627 = vsub.f32 %v449, %v595
    %v628 = vsub.f32 %v454, %v596
    %v629 = vsub.f32 %v459, %v597
    %v630 = vsub.f32 %v464, %v598
    %v631 = vsub.f32 %v469, %v599
    %v632 = vsub.f32 %v474, %v600
    %v633 = vsub.f32 %v479, %v601
    %v634 = vsub.f32 %v484, %v602
    %v635 = vsub.f32 %v489, %v603
    %v636 = vsub.f32 %v494, %v604
    %v637 = vsub.f32 %v499, %v605
    %v638 = vsub.f32 %v504, %v606
    %v639 = vsub.f32 %v509, %v607
    %v640 = vsub.f32 %v514, %v608
    %v641 = vsub.f32 %v519, %v609
    %v642 = vsub.f32 %v524, %v610
    %v643 = vsub.f32 %v529, %v611
    %v644 = vsub.f32 %v534, %v612
    %v645 = vsub.f32 %v539, %v613
    %v646 = vsub.f32 %v544, %v614
    %v647 = vsub.f32 %v549, %v615
    %v648 = vmul.f32 %v616, 0.007874016
    %v649 = vmul.f32 %v617, 0.007874016
    %v650 = vmul.f32 %v618, 0.007874016
    %v651 = vmul.f32 %v619, 0.007874016
    %v652 = vmul.f32 %v620, 0.007874016
    %v653 = vmul.f32 %v621, 0.007874016
    %v654 = vmul.f32 %v622, 0.007874016
    %v655 = vmul.f32 %v623, 0.007874016
    %v656 = vmul.f32 %v624, 0.007874016
    %v657 = vmul.f32 %v625, 0.007874016
    %v658 = vmul.f32 %v626, 0.007874016
    %v659 = vmul.f32 %v627, 0.007874016
    %v660 = vmul.f32 %v628, 0.007874016
    %v661 = vmul.f32 %v629, 0.007874016
    %v662 = vmul.f32 %v630, 0.007874016
    %v663 = vmul.f32 %v631, 0.007874016
    %v664 = vmul.f32 %v632, 0.007874016
    %v665 = vmul.f32 %v633, 0.007874016
    %v666 = vmul.f32 %v634, 0.007874016
    %v667 = vmul.f32 %v635, 0.007874016
    %v668 = vmul.f32 %v636, 0.007874016
    %v669 = vmul.f32 %v637, 0.007874016
    %v670 = vmul.f32 %v638, 0.007874016
    %v671 = vmul.f32 %v639, 0.007874016
    %v672 = vmul.f32 %v640, 0.007874016
    %v673 = vmul.f32 %v641, 0.007874016
    %v674 = vmul.f32 %v642, 0.007874016
    %v675 = vmul.f32 %v643, 0.007874016
    %v676 = vmul.f32 %v644, 0.007874016
    %v677 = vmul.f32 %v645, 0.007874016
    %v678 = vmul.f32 %v646, 0.007874016
    %v679 = vmul.f32 %v647, 0.007874016
    %v680 = vmax.f32 %v648, 0.0
    %v681 = vmax.f32 %v649, 0.0
    %v682 = vmax.f32 %v650, 0.0
    %v683 = vmax.f32 %v651, 0.0
    %v684 = vmax.f32 %v652, 0.0
    %v685 = vmax.f32 %v653, 0.0
    %v686 = vmax.f32 %v654, 0.0
    %v687 = vmax.f32 %v655, 0.0
    %v688 = vmax.f32 %v656, 0.0
    %v689 = vmax.f32 %v657, 0.0
    %v690 = vmax.f32 %v658, 0.0
    %v691 = vmax.f32 %v659, 0.0
    %v692 = vmax.f32 %v660, 0.0
    %v693 = vmax.f32 %v661, 0.0
    %v694 = vmax.f32 %v662, 0.0
    %v695 = vmax.f32 %v663, 0.0
    %v696 = vmax.f32 %v664, 0.0
    %v697 = vmax.f32 %v665, 0.0
    %v698 = vmax.f32 %v666, 0.0
    %v699 = vmax.f32 %v667, 0.0
    %v700 = vmax.f32 %v668, 0.0
    %v701 = vmax.f32 %v669, 0.0
    %v702 = vmax.f32 %v670, 0.0
    %v703 = vmax.f32 %v671, 0.0
    %v704 = vmax.f32 %v672, 0.0
    %v705 = vmax.f32 %v673, 0.0
    %v706 = vmax.f32 %v674, 0.0
    %v707 = vmax.f32 %v675, 0.0
    %v708 = vmax.f32 %v676, 0.0
    %v709 = vmax.f32 %v677, 0.0
    %v710 = vmax.f32 %v678, 0.0
    %v711 = vmax.f32 %v679, 0.0
    %v712 = vrsqrt.pop %v680
    %v713 = vmul.f32 %v680, %v712
    %vm714 = vcmp.eq.f32.partialorder %v680, inf
    %v715 = vsel %vm714, %v680, %v713
    %vm716 = vcmp.eq.f32.partialorder %v680, 0.0
    %v717 = vand.u32 %v680, 2147483648
    %v718 = vsel %vm716, %v717, %v715
    %v719 = vrsqrt.pop %v681
    %v720 = vmul.f32 %v681, %v719
    %vm721 = vcmp.eq.f32.partialorder %v681, inf
    %v722 = vsel %vm721, %v681, %v720
    %vm723 = vcmp.eq.f32.partialorder %v681, 0.0
    %v724 = vand.u32 %v681, 2147483648
    %v725 = vsel %vm723, %v724, %v722
    %v726 = vrsqrt.pop %v682
    %v727 = vmul.f32 %v682, %v726
    %vm728 = vcmp.eq.f32.partialorder %v682, inf
    %v729 = vsel %vm728, %v682, %v727
    %vm730 = vcmp.eq.f32.partialorder %v682, 0.0
    %v731 = vand.u32 %v682, 2147483648
    %v732 = vsel %vm730, %v731, %v729
    %v733 = vrsqrt.pop %v683
    %v734 = vmul.f32 %v683, %v733
    %vm735 = vcmp.eq.f32.partialorder %v683, inf
    %v736 = vsel %vm735, %v683, %v734
    %vm737 = vcmp.eq.f32.partialorder %v683, 0.0
    %v738 = vand.u32 %v683, 2147483648
    %v739 = vsel %vm737, %v738, %v736
    %v740 = vrsqrt.pop %v684
    %v741 = vmul.f32 %v684, %v740
    %vm742 = vcmp.eq.f32.partialorder %v684, inf
    %v743 = vsel %vm742, %v684, %v741
    %vm744 = vcmp.eq.f32.partialorder %v684, 0.0
    %v745 = vand.u32 %v684, 2147483648
    %v746 = vsel %vm744, %v745, %v743
    %v747 = vrsqrt.pop %v685
    %v748 = vmul.f32 %v685, %v747
    %vm749 = vcmp.eq.f32.partialorder %v685, inf
    %v750 = vsel %vm749, %v685, %v748
    %vm751 = vcmp.eq.f32.partialorder %v685, 0.0
    %v752 = vand.u32 %v685, 2147483648
    %v753 = vsel %vm751, %v752, %v750
    %v754 = vrsqrt.pop %v686
    %v755 = vmul.f32 %v686, %v754
    %vm756 = vcmp.eq.f32.partialorder %v686, inf
    %v757 = vsel %vm756, %v686, %v755
    %vm758 = vcmp.eq.f32.partialorder %v686, 0.0
    %v759 = vand.u32 %v686, 2147483648
    %v760 = vsel %vm758, %v759, %v757
    %v761 = vrsqrt.pop %v687
    %v762 = vmul.f32 %v687, %v761
    %vm763 = vcmp.eq.f32.partialorder %v687, inf
    %v764 = vsel %vm763, %v687, %v762
    %vm765 = vcmp.eq.f32.partialorder %v687, 0.0
    %v766 = vand.u32 %v687, 2147483648
    %v767 = vsel %vm765, %v766, %v764
    %v768 = vrsqrt.pop %v688
    %v769 = vmul.f32 %v688, %v768
    %vm770 = vcmp.eq.f32.partialorder %v688, inf
    %v771 = vsel %vm770, %v688, %v769
    %vm772 = vcmp.eq.f32.partialorder %v688, 0.0
    %v773 = vand.u32 %v688, 2147483648
    %v774 = vsel %vm772, %v773, %v771
    %v775 = vrsqrt.pop %v689
    %v776 = vmul.f32 %v689, %v775
    %vm777 = vcmp.eq.f32.partialorder %v689, inf
    %v778 = vsel %vm777, %v689, %v776
    %vm779 = vcmp.eq.f32.partialorder %v689, 0.0
    %v780 = vand.u32 %v689, 2147483648
    %v781 = vsel %vm779, %v780, %v778
    %v782 = vrsqrt.pop %v690
    %v783 = vmul.f32 %v690, %v782
    %vm784 = vcmp.eq.f32.partialorder %v690, inf
    %v785 = vsel %vm784, %v690, %v783
    %vm786 = vcmp.eq.f32.partialorder %v690, 0.0
    %v787 = vand.u32 %v690, 2147483648
    %v788 = vsel %vm786, %v787, %v785
    %v789 = vrsqrt.pop %v691
    %v790 = vmul.f32 %v691, %v789
    %vm791 = vcmp.eq.f32.partialorder %v691, inf
    %v792 = vsel %vm791, %v691, %v790
    %vm793 = vcmp.eq.f32.partialorder %v691, 0.0
    %v794 = vand.u32 %v691, 2147483648
    %v795 = vsel %vm793, %v794, %v792
    %v796 = vrsqrt.pop %v692
    %v797 = vmul.f32 %v692, %v796
    %vm798 = vcmp.eq.f32.partialorder %v692, inf
    %v799 = vsel %vm798, %v692, %v797
    %vm800 = vcmp.eq.f32.partialorder %v692, 0.0
    %v801 = vand.u32 %v692, 2147483648
    %v802 = vsel %vm800, %v801, %v799
    %v803 = vrsqrt.pop %v693
    %v804 = vmul.f32 %v693, %v803
    %vm805 = vcmp.eq.f32.partialorder %v693, inf
    %v806 = vsel %vm805, %v693, %v804
    %vm807 = vcmp.eq.f32.partialorder %v693, 0.0
    %v808 = vand.u32 %v693, 2147483648
    %v809 = vsel %vm807, %v808, %v806
    %v810 = vrsqrt.pop %v694
    %v811 = vmul.f32 %v694, %v810
    %vm812 = vcmp.eq.f32.partialorder %v694, inf
    %v813 = vsel %vm812, %v694, %v811
    %vm814 = vcmp.eq.f32.partialorder %v694, 0.0
    %v815 = vand.u32 %v694, 2147483648
    %v816 = vsel %vm814, %v815, %v813
    %v817 = vrsqrt.pop %v695
    %v818 = vmul.f32 %v695, %v817
    %vm819 = vcmp.eq.f32.partialorder %v695, inf
    %v820 = vsel %vm819, %v695, %v818
    %vm821 = vcmp.eq.f32.partialorder %v695, 0.0
    %v822 = vand.u32 %v695, 2147483648
    %v823 = vsel %vm821, %v822, %v820
    %v824 = vrsqrt.pop %v696
    %v825 = vmul.f32 %v696, %v824
    %vm826 = vcmp.eq.f32.partialorder %v696, inf
    %v827 = vsel %vm826, %v696, %v825
    %vm828 = vcmp.eq.f32.partialorder %v696, 0.0
    %v829 = vand.u32 %v696, 2147483648
    %v830 = vsel %vm828, %v829, %v827
    %v831 = vrsqrt.pop %v697
    %v832 = vmul.f32 %v697, %v831
    %vm833 = vcmp.eq.f32.partialorder %v697, inf
    %v834 = vsel %vm833, %v697, %v832
    %vm835 = vcmp.eq.f32.partialorder %v697, 0.0
    %v836 = vand.u32 %v697, 2147483648
    %v837 = vsel %vm835, %v836, %v834
    %v838 = vrsqrt.pop %v698
    %v839 = vmul.f32 %v698, %v838
    %vm840 = vcmp.eq.f32.partialorder %v698, inf
    %v841 = vsel %vm840, %v698, %v839
    %vm842 = vcmp.eq.f32.partialorder %v698, 0.0
    %v843 = vand.u32 %v698, 2147483648
    %v844 = vsel %vm842, %v843, %v841
    %v845 = vrsqrt.pop %v699
    %v846 = vmul.f32 %v699, %v845
    %vm847 = vcmp.eq.f32.partialorder %v699, inf
    %v848 = vsel %vm847, %v699, %v846
    %vm849 = vcmp.eq.f32.partialorder %v699, 0.0
    %v850 = vand.u32 %v699, 2147483648
    %v851 = vsel %vm849, %v850, %v848
    %v852 = vrsqrt.pop %v700
    %v853 = vmul.f32 %v700, %v852
    %vm854 = vcmp.eq.f32.partialorder %v700, inf
    %v855 = vsel %vm854, %v700, %v853
    %vm856 = vcmp.eq.f32.partialorder %v700, 0.0
    %v857 = vand.u32 %v700, 2147483648
    %v858 = vsel %vm856, %v857, %v855
    %v859 = vrsqrt.pop %v701
    %v860 = vmul.f32 %v701, %v859
    %vm861 = vcmp.eq.f32.partialorder %v701, inf
    %v862 = vsel %vm861, %v701, %v860
    %vm863 = vcmp.eq.f32.partialorder %v701, 0.0
    %v864 = vand.u32 %v701, 2147483648
    %v865 = vsel %vm863, %v864, %v862
    %v866 = vrsqrt.pop %v702
    %v867 = vmul.f32 %v702, %v866
    %vm868 = vcmp.eq.f32.partialorder %v702, inf
    %v869 = vsel %vm868, %v702, %v867
    %vm870 = vcmp.eq.f32.partialorder %v702, 0.0
    %v871 = vand.u32 %v702, 2147483648
    %v872 = vsel %vm870, %v871, %v869
    %v873 = vrsqrt.pop %v703
    %v874 = vmul.f32 %v703, %v873
    %vm875 = vcmp.eq.f32.partialorder %v703, inf
    %v876 = vsel %vm875, %v703, %v874
    %vm877 = vcmp.eq.f32.partialorder %v703, 0.0
    %v878 = vand.u32 %v703, 2147483648
    %v879 = vsel %vm877, %v878, %v876
    %v880 = vrsqrt.pop %v704
    %v881 = vmul.f32 %v704, %v880
    %vm882 = vcmp.eq.f32.partialorder %v704, inf
    %v883 = vsel %vm882, %v704, %v881
    %vm884 = vcmp.eq.f32.partialorder %v704, 0.0
    %v885 = vand.u32 %v704, 2147483648
    %v886 = vsel %vm884, %v885, %v883
    %v887 = vrsqrt.pop %v705
    %v888 = vmul.f32 %v705, %v887
    %vm889 = vcmp.eq.f32.partialorder %v705, inf
    %v890 = vsel %vm889, %v705, %v888
    %vm891 = vcmp.eq.f32.partialorder %v705, 0.0
    %v892 = vand.u32 %v705, 2147483648
    %v893 = vsel %vm891, %v892, %v890
    %v894 = vrsqrt.pop %v706
    %v895 = vmul.f32 %v706, %v894
    %vm896 = vcmp.eq.f32.partialorder %v706, inf
    %v897 = vsel %vm896, %v706, %v895
    %vm898 = vcmp.eq.f32.partialorder %v706, 0.0
    %v899 = vand.u32 %v706, 2147483648
    %v900 = vsel %vm898, %v899, %v897
    %v901 = vrsqrt.pop %v707
    %v902 = vmul.f32 %v707, %v901
    %vm903 = vcmp.eq.f32.partialorder %v707, inf
    %v904 = vsel %vm903, %v707, %v902
    %vm905 = vcmp.eq.f32.partialorder %v707, 0.0
    %v906 = vand.u32 %v707, 2147483648
    %v907 = vsel %vm905, %v906, %v904
    %v908 = vrsqrt.pop %v708
    %v909 = vmul.f32 %v708, %v908
    %vm910 = vcmp.eq.f32.partialorder %v708, inf
    %v911 = vsel %vm910, %v708, %v909
    %vm912 = vcmp.eq.f32.partialorder %v708, 0.0
    %v913 = vand.u32 %v708, 2147483648
    %v914 = vsel %vm912, %v913, %v911
    %v915 = vrsqrt.pop %v709
    %v916 = vmul.f32 %v709, %v915
    %vm917 = vcmp.eq.f32.partialorder %v709, inf
    %v918 = vsel %vm917, %v709, %v916
    %vm919 = vcmp.eq.f32.partialorder %v709, 0.0
    %v920 = vand.u32 %v709, 2147483648
    %v921 = vsel %vm919, %v920, %v918
    %v922 = vrsqrt.pop %v710
    %v923 = vmul.f32 %v710, %v922
    %vm924 = vcmp.eq.f32.partialorder %v710, inf
    %v925 = vsel %vm924, %v710, %v923
    %vm926 = vcmp.eq.f32.partialorder %v710, 0.0
    %v927 = vand.u32 %v710, 2147483648
    %v928 = vsel %vm926, %v927, %v925
    %v929 = vrsqrt.pop %v711
    %v930 = vmul.f32 %v711, %v929
    %vm931 = vcmp.eq.f32.partialorder %v711, inf
    %v932 = vsel %vm931, %v711, %v930
    %vm933 = vcmp.eq.f32.partialorder %v711, 0.0
    %v934 = vand.u32 %v711, 2147483648
    %v935 = vsel %vm933, %v934, %v932
    %v936 = vadd.f32 %v718, 1e-06
    %v937 = vadd.f32 %v725, 1e-06
    %v938 = vadd.f32 %v732, 1e-06
    %v939 = vadd.f32 %v739, 1e-06
    %v940 = vadd.f32 %v746, 1e-06
    %v941 = vadd.f32 %v753, 1e-06
    %v942 = vadd.f32 %v760, 1e-06
    %v943 = vadd.f32 %v767, 1e-06
    %v944 = vadd.f32 %v774, 1e-06
    %v945 = vadd.f32 %v781, 1e-06
    %v946 = vadd.f32 %v788, 1e-06
    %v947 = vadd.f32 %v795, 1e-06
    %v948 = vadd.f32 %v802, 1e-06
    %v949 = vadd.f32 %v809, 1e-06
    %v950 = vadd.f32 %v816, 1e-06
    %v951 = vadd.f32 %v823, 1e-06
    %v952 = vadd.f32 %v830, 1e-06
    %v953 = vadd.f32 %v837, 1e-06
    %v954 = vadd.f32 %v844, 1e-06
    %v955 = vadd.f32 %v851, 1e-06
    %v956 = vadd.f32 %v858, 1e-06
    %v957 = vadd.f32 %v865, 1e-06
    %v958 = vadd.f32 %v872, 1e-06
    %v959 = vadd.f32 %v879, 1e-06
    %v960 = vadd.f32 %v886, 1e-06
    %v961 = vadd.f32 %v893, 1e-06
    %v962 = vadd.f32 %v900, 1e-06
    %v963 = vadd.f32 %v907, 1e-06
    %v964 = vadd.f32 %v914, 1e-06
    %v965 = vadd.f32 %v921, 1e-06
    %v966 = vadd.f32 %v928, 1e-06
    %v967 = vadd.f32 %v935, 1e-06
    %v968 = vrcp.pop %v936
    %v969 = vrcp.pop %v937
    %v970 = vrcp.pop %v938
    %v971 = vrcp.pop %v939
    %v972 = vrcp.pop %v940
    %v973 = vrcp.pop %v941
    %v974 = vrcp.pop %v942
    %v975 = vrcp.pop %v943
    %v976 = vrcp.pop %v944
    %v977 = vrcp.pop %v945
    %v978 = vrcp.pop %v946
    %v979 = vrcp.pop %v947
    %v980 = vrcp.pop %v948
    %v981 = vrcp.pop %v949
    %v982 = vrcp.pop %v950
    %v983 = vrcp.pop %v951
    %v984 = vrcp.pop %v952
    %v985 = vrcp.pop %v953
    %v986 = vrcp.pop %v954
    %v987 = vrcp.pop %v955
    %v988 = vrcp.pop %v956
    %v989 = vrcp.pop %v957
    %v990 = vrcp.pop %v958
    %v991 = vrcp.pop %v959
    %v992 = vrcp.pop %v960
    %v993 = vrcp.pop %v961
    %v994 = vrcp.pop %v962
    %v995 = vrcp.pop %v963
    %v996 = vrcp.pop %v964
    %v997 = vrcp.pop %v965
    %v998 = vrcp.pop %v966
    %v999 = vrcp.pop %v967
    %v1000 = vmul.f32 %v936, %v968
    %v1001 = vmul.f32 %v937, %v969
    %v1002 = vmul.f32 %v938, %v970
    %v1003 = vmul.f32 %v939, %v971
    %v1004 = vmul.f32 %v940, %v972
    %v1005 = vmul.f32 %v941, %v973
    %v1006 = vmul.f32 %v942, %v974
    %v1007 = vmul.f32 %v943, %v975
    %v1008 = vmul.f32 %v944, %v976
    %v1009 = vmul.f32 %v945, %v977
    %v1010 = vmul.f32 %v946, %v978
    %v1011 = vmul.f32 %v947, %v979
    %v1012 = vmul.f32 %v948, %v980
    %v1013 = vmul.f32 %v949, %v981
    %v1014 = vmul.f32 %v950, %v982
    %v1015 = vmul.f32 %v951, %v983
    %v1016 = vmul.f32 %v952, %v984
    %v1017 = vmul.f32 %v953, %v985
    %v1018 = vmul.f32 %v954, %v986
    %v1019 = vmul.f32 %v955, %v987
    %v1020 = vmul.f32 %v956, %v988
    %v1021 = vmul.f32 %v957, %v989
    %v1022 = vmul.f32 %v958, %v990
    %v1023 = vmul.f32 %v959, %v991
    %v1024 = vmul.f32 %v960, %v992
    %v1025 = vmul.f32 %v961, %v993
    %v1026 = vmul.f32 %v962, %v994
    %v1027 = vmul.f32 %v963, %v995
    %v1028 = vmul.f32 %v964, %v996
    %v1029 = vmul.f32 %v965, %v997
    %v1030 = vmul.f32 %v966, %v998
    %v1031 = vmul.f32 %v967, %v999
    %v1032 = vsub.f32 2.0, %v1000
    %v1033 = vsub.f32 2.0, %v1001
    %v1034 = vsub.f32 2.0, %v1002
    %v1035 = vsub.f32 2.0, %v1003
    %v1036 = vsub.f32 2.0, %v1004
    %v1037 = vsub.f32 2.0, %v1005
    %v1038 = vsub.f32 2.0, %v1006
    %v1039 = vsub.f32 2.0, %v1007
    %v1040 = vsub.f32 2.0, %v1008
    %v1041 = vsub.f32 2.0, %v1009
    %v1042 = vsub.f32 2.0, %v1010
    %v1043 = vsub.f32 2.0, %v1011
    %v1044 = vsub.f32 2.0, %v1012
    %v1045 = vsub.f32 2.0, %v1013
    %v1046 = vsub.f32 2.0, %v1014
    %v1047 = vsub.f32 2.0, %v1015
    %v1048 = vsub.f32 2.0, %v1016
    %v1049 = vsub.f32 2.0, %v1017
    %v1050 = vsub.f32 2.0, %v1018
    %v1051 = vsub.f32 2.0, %v1019
    %v1052 = vsub.f32 2.0, %v1020
    %v1053 = vsub.f32 2.0, %v1021
    %v1054 = vsub.f32 2.0, %v1022
    %v1055 = vsub.f32 2.0, %v1023
    %v1056 = vsub.f32 2.0, %v1024
    %v1057 = vsub.f32 2.0, %v1025
    %v1058 = vsub.f32 2.0, %v1026
    %v1059 = vsub.f32 2.0, %v1027
    %v1060 = vsub.f32 2.0, %v1028
    %v1061 = vsub.f32 2.0, %v1029
    %v1062 = vsub.f32 2.0, %v1030
    %v1063 = vsub.f32 2.0, %v1031
    %v1064 = vmul.f32 %v968, %v1032
    %v1065 = vmul.f32 %v969, %v1033
    %v1066 = vmul.f32 %v970, %v1034
    %v1067 = vmul.f32 %v971, %v1035
    %v1068 = vmul.f32 %v972, %v1036
    %v1069 = vmul.f32 %v973, %v1037
    %v1070 = vmul.f32 %v974, %v1038
    %v1071 = vmul.f32 %v975, %v1039
    %v1072 = vmul.f32 %v976, %v1040
    %v1073 = vmul.f32 %v977, %v1041
    %v1074 = vmul.f32 %v978, %v1042
    %v1075 = vmul.f32 %v979, %v1043
    %v1076 = vmul.f32 %v980, %v1044
    %v1077 = vmul.f32 %v981, %v1045
    %v1078 = vmul.f32 %v982, %v1046
    %v1079 = vmul.f32 %v983, %v1047
    %v1080 = vmul.f32 %v984, %v1048
    %v1081 = vmul.f32 %v985, %v1049
    %v1082 = vmul.f32 %v986, %v1050
    %v1083 = vmul.f32 %v987, %v1051
    %v1084 = vmul.f32 %v988, %v1052
    %v1085 = vmul.f32 %v989, %v1053
    %v1086 = vmul.f32 %v990, %v1054
    %v1087 = vmul.f32 %v991, %v1055
    %v1088 = vmul.f32 %v992, %v1056
    %v1089 = vmul.f32 %v993, %v1057
    %v1090 = vmul.f32 %v994, %v1058
    %v1091 = vmul.f32 %v995, %v1059
    %v1092 = vmul.f32 %v996, %v1060
    %v1093 = vmul.f32 %v997, %v1061
    %v1094 = vmul.f32 %v998, %v1062
    %v1095 = vmul.f32 %v999, %v1063
    %v1096 = vld [vmem:[#allocation2] sm:$0x1]
    %v1097 = vld [vmem:[#allocation2 + $0x1] sm:$0x1]
    %1099 = vset.pattern.permute.xlu0 0
    %1100 = vperm.xlu0 %1099, %v552
    %v1101 = vpop.permute.xlu0 %1100
    %1104 = vset.pattern.permute.xlu0 0
    %1105 = vperm.xlu0 %1104, %v553
    %v1106 = vpop.permute.xlu0 %1105
    %1109 = vset.pattern.permute.xlu0 0
    %1110 = vperm.xlu0 %1109, %v554
    %v1111 = vpop.permute.xlu0 %1110
    %1114 = vset.pattern.permute.xlu0 0
    %1115 = vperm.xlu0 %1114, %v555
    %v1116 = vpop.permute.xlu0 %1115
    %1119 = vset.pattern.permute.xlu0 0
    %1120 = vperm.xlu0 %1119, %v556
    %v1121 = vpop.permute.xlu0 %1120
    %1124 = vset.pattern.permute.xlu0 0
    %1125 = vperm.xlu0 %1124, %v557
    %v1126 = vpop.permute.xlu0 %1125
    %1129 = vset.pattern.permute.xlu0 0
    %1130 = vperm.xlu0 %1129, %v558
    %v1131 = vpop.permute.xlu0 %1130
    %1134 = vset.pattern.permute.xlu0 0
    %1135 = vperm.xlu0 %1134, %v559
    %v1136 = vpop.permute.xlu0 %1135
    %1139 = vset.pattern.permute.xlu0 0
    %1140 = vperm.xlu0 %1139, %v560
    %v1141 = vpop.permute.xlu0 %1140
    %1144 = vset.pattern.permute.xlu0 0
    %1145 = vperm.xlu0 %1144, %v561
    %v1146 = vpop.permute.xlu0 %1145
    %1149 = vset.pattern.permute.xlu0 0
    %1150 = vperm.xlu0 %1149, %v562
    %v1151 = vpop.permute.xlu0 %1150
    %1154 = vset.pattern.permute.xlu0 0
    %1155 = vperm.xlu0 %1154, %v563
    %v1156 = vpop.permute.xlu0 %1155
    %1159 = vset.pattern.permute.xlu0 0
    %1160 = vperm.xlu0 %1159, %v564
    %v1161 = vpop.permute.xlu0 %1160
    %1164 = vset.pattern.permute.xlu0 0
    %1165 = vperm.xlu0 %1164, %v565
    %v1166 = vpop.permute.xlu0 %1165
    %1169 = vset.pattern.permute.xlu0 0
    %1170 = vperm.xlu0 %1169, %v566
    %v1171 = vpop.permute.xlu0 %1170
    %1174 = vset.pattern.permute.xlu0 0
    %1175 = vperm.xlu0 %1174, %v567
    %v1176 = vpop.permute.xlu0 %1175
    %1179 = vset.pattern.permute.xlu0 0
    %1180 = vperm.xlu0 %1179, %v568
    %v1181 = vpop.permute.xlu0 %1180
    %1184 = vset.pattern.permute.xlu0 0
    %1185 = vperm.xlu0 %1184, %v569
    %v1186 = vpop.permute.xlu0 %1185
    %1189 = vset.pattern.permute.xlu0 0
    %1190 = vperm.xlu0 %1189, %v570
    %v1191 = vpop.permute.xlu0 %1190
    %1194 = vset.pattern.permute.xlu0 0
    %1195 = vperm.xlu0 %1194, %v571
    %v1196 = vpop.permute.xlu0 %1195
    %1199 = vset.pattern.permute.xlu0 0
    %1200 = vperm.xlu0 %1199, %v572
    %v1201 = vpop.permute.xlu0 %1200
    %1204 = vset.pattern.permute.xlu0 0
    %1205 = vperm.xlu0 %1204, %v573
    %v1206 = vpop.permute.xlu0 %1205
    %1209 = vset.pattern.permute.xlu0 0
    %1210 = vperm.xlu0 %1209, %v574
    %v1211 = vpop.permute.xlu0 %1210
    %1214 = vset.pattern.permute.xlu0 0
    %1215 = vperm.xlu0 %1214, %v575
    %v1216 = vpop.permute.xlu0 %1215
    %1219 = vset.pattern.permute.xlu0 0
    %1220 = vperm.xlu0 %1219, %v576
    %v1221 = vpop.permute.xlu0 %1220
    %1224 = vset.pattern.permute.xlu0 0
    %1225 = vperm.xlu0 %1224, %v577
    %v1226 = vpop.permute.xlu0 %1225
    %1229 = vset.pattern.permute.xlu0 0
    %1230 = vperm.xlu0 %1229, %v578
    %v1231 = vpop.permute.xlu0 %1230
    %1234 = vset.pattern.permute.xlu0 0
    %1235 = vperm.xlu0 %1234, %v579
    %v1236 = vpop.permute.xlu0 %1235
    %1239 = vset.pattern.permute.xlu0 0
    %1240 = vperm.xlu0 %1239, %v580
    %v1241 = vpop.permute.xlu0 %1240
    %1244 = vset.pattern.permute.xlu0 0
    %1245 = vperm.xlu0 %1244, %v581
    %v1246 = vpop.permute.xlu0 %1245
    %1249 = vset.pattern.permute.xlu0 0
    %1250 = vperm.xlu0 %1249, %v582
    %v1251 = vpop.permute.xlu0 %1250
    %1254 = vset.pattern.permute.xlu0 0
    %1255 = vperm.xlu0 %1254, %v583
    %v1256 = vpop.permute.xlu0 %1255
    %v1258 = vsub.f32 %v38, %v1101
    %v1259 = vsub.f32 %v39, %v1106
    %v1260 = vsub.f32 %v40, %v1111
    %v1261 = vsub.f32 %v41, %v1116
    %v1262 = vsub.f32 %v42, %v1121
    %v1263 = vsub.f32 %v43, %v1126
    %v1264 = vsub.f32 %v44, %v1131
    %v1265 = vsub.f32 %v45, %v1136
    %v1266 = vsub.f32 %v46, %v1141
    %v1267 = vsub.f32 %v47, %v1146
    %v1268 = vsub.f32 %v48, %v1151
    %v1269 = vsub.f32 %v49, %v1156
    %v1270 = vsub.f32 %v50, %v1161
    %v1271 = vsub.f32 %v51, %v1166
    %v1272 = vsub.f32 %v52, %v1171
    %v1273 = vsub.f32 %v53, %v1176
    %v1274 = vsub.f32 %v54, %v1181
    %v1275 = vsub.f32 %v55, %v1186
    %v1276 = vsub.f32 %v56, %v1191
    %v1277 = vsub.f32 %v57, %v1196
    %v1278 = vsub.f32 %v58, %v1201
    %v1279 = vsub.f32 %v59, %v1206
    %v1280 = vsub.f32 %v60, %v1211
    %v1281 = vsub.f32 %v61, %v1216
    %v1282 = vsub.f32 %v62, %v1221
    %v1283 = vsub.f32 %v63, %v1226
    %v1284 = vsub.f32 %v64, %v1231
    %v1285 = vsub.f32 %v65, %v1236
    %v1286 = vsub.f32 %v66, %v1241
    %v1287 = vsub.f32 %v67, %v1246
    %v1288 = vsub.f32 %v68, %v1251
    %v1289 = vsub.f32 %v69, %v1256
    %1291 = vset.pattern.permute.xlu0 0
    %1292 = vperm.xlu0 %1291, %v1064
    %v1293 = vpop.permute.xlu0 %1292
    %1296 = vset.pattern.permute.xlu0 0
    %1297 = vperm.xlu0 %1296, %v1065
    %v1298 = vpop.permute.xlu0 %1297
    %1301 = vset.pattern.permute.xlu0 0
    %1302 = vperm.xlu0 %1301, %v1066
    %v1303 = vpop.permute.xlu0 %1302
    %1306 = vset.pattern.permute.xlu0 0
    %1307 = vperm.xlu0 %1306, %v1067
    %v1308 = vpop.permute.xlu0 %1307
    %1311 = vset.pattern.permute.xlu0 0
    %1312 = vperm.xlu0 %1311, %v1068
    %v1313 = vpop.permute.xlu0 %1312
    %1316 = vset.pattern.permute.xlu0 0
    %1317 = vperm.xlu0 %1316, %v1069
    %v1318 = vpop.permute.xlu0 %1317
    %1321 = vset.pattern.permute.xlu0 0
    %1322 = vperm.xlu0 %1321, %v1070
    %v1323 = vpop.permute.xlu0 %1322
    %1326 = vset.pattern.permute.xlu0 0
    %1327 = vperm.xlu0 %1326, %v1071
    %v1328 = vpop.permute.xlu0 %1327
    %1331 = vset.pattern.permute.xlu0 0
    %1332 = vperm.xlu0 %1331, %v1072
    %v1333 = vpop.permute.xlu0 %1332
    %1336 = vset.pattern.permute.xlu0 0
    %1337 = vperm.xlu0 %1336, %v1073
    %v1338 = vpop.permute.xlu0 %1337
    %1341 = vset.pattern.permute.xlu0 0
    %1342 = vperm.xlu0 %1341, %v1074
    %v1343 = vpop.permute.xlu0 %1342
    %1346 = vset.pattern.permute.xlu0 0
    %1347 = vperm.xlu0 %1346, %v1075
    %v1348 = vpop.permute.xlu0 %1347
    %1351 = vset.pattern.permute.xlu0 0
    %1352 = vperm.xlu0 %1351, %v1076
    %v1353 = vpop.permute.xlu0 %1352
    %1356 = vset.pattern.permute.xlu0 0
    %1357 = vperm.xlu0 %1356, %v1077
    %v1358 = vpop.permute.xlu0 %1357
    %1361 = vset.pattern.permute.xlu0 0
    %1362 = vperm.xlu0 %1361, %v1078
    %v1363 = vpop.permute.xlu0 %1362
    %1366 = vset.pattern.permute.xlu0 0
    %1367 = vperm.xlu0 %1366, %v1079
    %v1368 = vpop.permute.xlu0 %1367
    %1371 = vset.pattern.permute.xlu0 0
    %1372 = vperm.xlu0 %1371, %v1080
    %v1373 = vpop.permute.xlu0 %1372
    %1376 = vset.pattern.permute.xlu0 0
    %1377 = vperm.xlu0 %1376, %v1081
    %v1378 = vpop.permute.xlu0 %1377
    %1381 = vset.pattern.permute.xlu0 0
    %1382 = vperm.xlu0 %1381, %v1082
    %v1383 = vpop.permute.xlu0 %1382
    %1386 = vset.pattern.permute.xlu0 0
    %1387 = vperm.xlu0 %1386, %v1083
    %v1388 = vpop.permute.xlu0 %1387
    %1391 = vset.pattern.permute.xlu0 0
    %1392 = vperm.xlu0 %1391, %v1084
    %v1393 = vpop.permute.xlu0 %1392
    %1396 = vset.pattern.permute.xlu0 0
    %1397 = vperm.xlu0 %1396, %v1085
    %v1398 = vpop.permute.xlu0 %1397
    %1401 = vset.pattern.permute.xlu0 0
    %1402 = vperm.xlu0 %1401, %v1086
    %v1403 = vpop.permute.xlu0 %1402
    %1406 = vset.pattern.permute.xlu0 0
    %1407 = vperm.xlu0 %1406, %v1087
    %v1408 = vpop.permute.xlu0 %1407
    %1411 = vset.pattern.permute.xlu0 0
    %1412 = vperm.xlu0 %1411, %v1088
    %v1413 = vpop.permute.xlu0 %1412
    %1416 = vset.pattern.permute.xlu0 0
    %1417 = vperm.xlu0 %1416, %v1089
    %v1418 = vpop.permute.xlu0 %1417
    %1421 = vset.pattern.permute.xlu0 0
    %1422 = vperm.xlu0 %1421, %v1090
    %v1423 = vpop.permute.xlu0 %1422
    %1426 = vset.pattern.permute.xlu0 0
    %1427 = vperm.xlu0 %1426, %v1091
    %v1428 = vpop.permute.xlu0 %1427
    %1431 = vset.pattern.permute.xlu0 0
    %1432 = vperm.xlu0 %1431, %v1092
    %v1433 = vpop.permute.xlu0 %1432
    %1436 = vset.pattern.permute.xlu0 0
    %1437 = vperm.xlu0 %1436, %v1093
    %v1438 = vpop.permute.xlu0 %1437
    %1441 = vset.pattern.permute.xlu0 0
    %1442 = vperm.xlu0 %1441, %v1094
    %v1443 = vpop.permute.xlu0 %1442
    %1446 = vset.pattern.permute.xlu0 0
    %1447 = vperm.xlu0 %1446, %v1095
    %v1448 = vpop.permute.xlu0 %1447
    %v1450 = vmul.f32 %v1258, %v1293
    %v1451 = vmul.f32 %v1259, %v1298
    %v1452 = vmul.f32 %v1260, %v1303
    %v1453 = vmul.f32 %v1261, %v1308
    %v1454 = vmul.f32 %v1262, %v1313
    %v1455 = vmul.f32 %v1263, %v1318
    %v1456 = vmul.f32 %v1264, %v1323
    %v1457 = vmul.f32 %v1265, %v1328
    %v1458 = vmul.f32 %v1266, %v1333
    %v1459 = vmul.f32 %v1267, %v1338
    %v1460 = vmul.f32 %v1268, %v1343
    %v1461 = vmul.f32 %v1269, %v1348
    %v1462 = vmul.f32 %v1270, %v1353
    %v1463 = vmul.f32 %v1271, %v1358
    %v1464 = vmul.f32 %v1272, %v1363
    %v1465 = vmul.f32 %v1273, %v1368
    %v1466 = vmul.f32 %v1274, %v1373
    %v1467 = vmul.f32 %v1275, %v1378
    %v1468 = vmul.f32 %v1276, %v1383
    %v1469 = vmul.f32 %v1277, %v1388
    %v1470 = vmul.f32 %v1278, %v1393
    %v1471 = vmul.f32 %v1279, %v1398
    %v1472 = vmul.f32 %v1280, %v1403
    %v1473 = vmul.f32 %v1281, %v1408
    %v1474 = vmul.f32 %v1282, %v1413
    %v1475 = vmul.f32 %v1283, %v1418
    %v1476 = vmul.f32 %v1284, %v1423
    %v1477 = vmul.f32 %v1285, %v1428
    %v1478 = vmul.f32 %v1286, %v1433
    %v1479 = vmul.f32 %v1287, %v1438
    %v1480 = vmul.f32 %v1288, %v1443
    %v1481 = vmul.f32 %v1289, %v1448
    %v1482 = vlaneseq
    %v1483 = vshrl.u32 %v1482, 7
    %v1484 = vsub.s32 0, %v1483
    %v1485 = vrot.slane %v1096, %v1484
    %v1486 = vmul.f32 %v1450, %v1485
    %v1487 = vmul.f32 %v1451, %v1485
    %v1488 = vmul.f32 %v1452, %v1485
    %v1489 = vmul.f32 %v1453, %v1485
    %v1490 = vmul.f32 %v1454, %v1485
    %v1491 = vmul.f32 %v1455, %v1485
    %v1492 = vmul.f32 %v1456, %v1485
    %v1493 = vmul.f32 %v1457, %v1485
    %v1494 = vmul.f32 %v1458, %v1485
    %v1495 = vmul.f32 %v1459, %v1485
    %v1496 = vmul.f32 %v1460, %v1485
    %v1497 = vmul.f32 %v1461, %v1485
    %v1498 = vmul.f32 %v1462, %v1485
    %v1499 = vmul.f32 %v1463, %v1485
    %v1500 = vmul.f32 %v1464, %v1485
    %v1501 = vmul.f32 %v1465, %v1485
    %v1502 = vmul.f32 %v1466, %v1485
    %v1503 = vmul.f32 %v1467, %v1485
    %v1504 = vmul.f32 %v1468, %v1485
    %v1505 = vmul.f32 %v1469, %v1485
    %v1506 = vmul.f32 %v1470, %v1485
    %v1507 = vmul.f32 %v1471, %v1485
    %v1508 = vmul.f32 %v1472, %v1485
    %v1509 = vmul.f32 %v1473, %v1485
    %v1510 = vmul.f32 %v1474, %v1485
    %v1511 = vmul.f32 %v1475, %v1485
    %v1512 = vmul.f32 %v1476, %v1485
    %v1513 = vmul.f32 %v1477, %v1485
    %v1514 = vmul.f32 %v1478, %v1485
    %v1515 = vmul.f32 %v1479, %v1485
    %v1516 = vmul.f32 %v1480, %v1485
    %v1517 = vmul.f32 %v1481, %v1485
    %v1518 = vlaneseq
    %v1519 = vshrl.u32 %v1518, 7
    %v1520 = vsub.s32 0, %v1519
    %v1521 = vrot.slane %v1097, %v1520
    %v1522 = vadd.f32 %v1486, %v1521
    %v1523 = vadd.f32 %v1487, %v1521
    %v1524 = vadd.f32 %v1488, %v1521
    %v1525 = vadd.f32 %v1489, %v1521
    %v1526 = vadd.f32 %v1490, %v1521
    %v1527 = vadd.f32 %v1491, %v1521
    %v1528 = vadd.f32 %v1492, %v1521
    %v1529 = vadd.f32 %v1493, %v1521
    %v1530 = vadd.f32 %v1494, %v1521
    %v1531 = vadd.f32 %v1495, %v1521
    %v1532 = vadd.f32 %v1496, %v1521
    %v1533 = vadd.f32 %v1497, %v1521
    %v1534 = vadd.f32 %v1498, %v1521
    %v1535 = vadd.f32 %v1499, %v1521
    %v1536 = vadd.f32 %v1500, %v1521
    %v1537 = vadd.f32 %v1501, %v1521
    %v1538 = vadd.f32 %v1502, %v1521
    %v1539 = vadd.f32 %v1503, %v1521
    %v1540 = vadd.f32 %v1504, %v1521
    %v1541 = vadd.f32 %v1505, %v1521
    %v1542 = vadd.f32 %v1506, %v1521
    %v1543 = vadd.f32 %v1507, %v1521
    %v1544 = vadd.f32 %v1508, %v1521
    %v1545 = vadd.f32 %v1509, %v1521
    %v1546 = vadd.f32 %v1510, %v1521
    %v1547 = vadd.f32 %v1511, %v1521
    %v1548 = vadd.f32 %v1512, %v1521
    %v1549 = vadd.f32 %v1513, %v1521
    %v1550 = vadd.f32 %v1514, %v1521
    %v1551 = vadd.f32 %v1515, %v1521
    %v1552 = vadd.f32 %v1516, %v1521
    %v1553 = vadd.f32 %v1517, %v1521
    %1554 = vst [vmem:[#allocation7] sm:$0xff] %v1522
    %1555 = vst [vmem:[#allocation7 + $0x8] sm:$0xff] %v1523
    %1556 = vst [vmem:[#allocation7 + $0x10] sm:$0xff] %v1524
    %1557 = vst [vmem:[#allocation7 + $0x18] sm:$0xff] %v1525
    %1558 = vst [vmem:[#allocation7 + $0x20] sm:$0xff] %v1526
    %1559 = vst [vmem:[#allocation7 + $0x28] sm:$0xff] %v1527
    %1560 = vst [vmem:[#allocation7 + $0x30] sm:$0xff] %v1528
    %1561 = vst [vmem:[#allocation7 + $0x38] sm:$0xff] %v1529
    %1562 = vst [vmem:[#allocation7 + $0x40] sm:$0xff] %v1530
    %1563 = vst [vmem:[#allocation7 + $0x48] sm:$0xff] %v1531
    %1564 = vst [vmem:[#allocation7 + $0x50] sm:$0xff] %v1532
    %1565 = vst [vmem:[#allocation7 + $0x58] sm:$0xff] %v1533
    %1566 = vst [vmem:[#allocation7 + $0x60] sm:$0xff] %v1534
    %1567 = vst [vmem:[#allocation7 + $0x68] sm:$0xff] %v1535
    %1568 = vst [vmem:[#allocation7 + $0x70] sm:$0xff] %v1536
    %1569 = vst [vmem:[#allocation7 + $0x78] sm:$0xff] %v1537
    %1570 = vst [vmem:[#allocation7 + $0x80] sm:$0xff] %v1538
    %1571 = vst [vmem:[#allocation7 + $0x88] sm:$0xff] %v1539
    %1572 = vst [vmem:[#allocation7 + $0x90] sm:$0xff] %v1540
    %1573 = vst [vmem:[#allocation7 + $0x98] sm:$0xff] %v1541
    %1574 = vst [vmem:[#allocation7 + $0xa0] sm:$0xff] %v1542
    %1575 = vst [vmem:[#allocation7 + $0xa8] sm:$0xff] %v1543
    %1576 = vst [vmem:[#allocation7 + $0xb0] sm:$0xff] %v1544
    %1577 = vst [vmem:[#allocation7 + $0xb8] sm:$0xff] %v1545
    %1578 = vst [vmem:[#allocation7 + $0xc0] sm:$0xff] %v1546
    %1579 = vst [vmem:[#allocation7 + $0xc8] sm:$0xff] %v1547
    %1580 = vst [vmem:[#allocation7 + $0xd0] sm:$0xff] %v1548
    %1581 = vst [vmem:[#allocation7 + $0xd8] sm:$0xff] %v1549
    %1582 = vst [vmem:[#allocation7 + $0xe0] sm:$0xff] %v1550
    %1583 = vst [vmem:[#allocation7 + $0xe8] sm:$0xff] %v1551
    %1584 = vst [vmem:[#allocation7 + $0xf0] sm:$0xff] %v1552
    %1585 = vst [vmem:[#allocation7 + $0xf8] sm:$0xff] %v1553
    // Predicated region
    $region18: #{tpu_custom_call.1} parent=1 // pred_check
      _
    $region19: #{tpu_custom_call.1} parent=1 // pred_check_branch
      %1587 = sbr.rel (0) target = $region21
    $region20: #{tpu_custom_call.1} parent=1 // pred_region
      %s1589 = ssub.s32 4096, 4096
      %1590 = vsyncadd [#allocation4], %s1589
      %s1591 = sshll.u32 [#allocation7], 4
      %s1592 = int_to_ptr.vmem [resolvable:$true] %s1591
      %1597 = dma.vmem_to_hbm [thread:$0]  %s1592, 4096, %s2, [#allocation4], 128, 128, 8
    $region21: #{tpu_custom_call.1} parent=1 // pred_fallthru
      _
    // Predicated region
    $region22: #{tpu_custom_call.1} parent=1 // pred_check
      _
    $region23: #{tpu_custom_call.1} parent=1 // pred_check_branch
      %1599 = sbr.rel (0) target = $region25
    $region24: #{tpu_custom_call.1} parent=1 // pred_region
      %1600 = dma.done [#allocation4], 4096
    $region25: #{tpu_custom_call.1} parent=1 // pred_fallthru
      _
    %1601 = vsyncpa [#allocation3], 1
    %1602 = vsyncpa [#allocation6], 1
    %1603 = vsyncpa [#allocation4], 1

// kernel: tpu_custom_call.1
$region0: #{tpu_custom_call.1}
  #allocation0 [shape = 'u32[]', space=smem, size = 0x4, offset = 0x4, fixed_abs, tag = 'smem constant byte address 0x4 - core index']
  #allocation1 [shape = 'u32[144,128]{1,0:T(1,128)}', space=vmem, size = 0x12000, scoped, tag = 'internal scratch']
  %s0 = inlined_call_operand.hbm [shape: f32[6,128], index: 0, kind: input, shape index: {}]
  %s1 = inlined_call_operand.hbm [shape: f32[16,128], index: 1, kind: input, shape index: {}]
  %s2 = inlined_call_operand.hbm [shape: f32[16,128], index: 2, kind: input, shape index: {}]
  %s3 = inlined_call_operand.hbm [shape: f32[16,128], index: 3, kind: input, shape index: {}]
  %s4 = inlined_call_operand.hbm [shape: f32[16,128], index: 4, kind: output, shape index: {0}]
  %s5 = inlined_call_operand.hbm [shape: f32[16,128], index: 5, kind: output, shape index: {1}]
  %s6 = inlined_call_operand.hbm [shape: f32[16,128], index: 6, kind: output, shape index: {2}]
  %7 = xla_tuple %s4, %s5, %s6
  %s8 = sld [smem:[#allocation0]]
  $region58: #{tpu_custom_call.1} parent=0
    _
  %s10 = ssub.s32 1, %s8
  %s11 = scalar_select 0, %s10, %s8
  $region1: #{tpu_custom_call.1} parent=0
    #allocation2 [shape = 'u8[4096]{0}', space=vmem, size = 0x1000, scoped, tag = 'input window, operand 0, single buffered']
    #allocation3 [shape = 's32[1]{0}', space=sflag, size = 0x4, scoped, tag = 'scoped memory for tpu_custom_call.1']
    #allocation4 [shape = 's32[1]{0}', space=sflag, size = 0x4, scoped, tag = 'scoped memory for tpu_custom_call.1']
    #allocation5 [shape = 'u8[8192]{0}', space=vmem, size = 0x2000, scoped, tag = 'input window, operand 1, single buffered']
    #allocation6 [shape = 's32[1]{0}', space=sflag, size = 0x4, scoped, tag = 'scoped memory for tpu_custom_call.1']
    #allocation7 [shape = 'u8[8192]{0}', space=vmem, size = 0x2000, scoped, tag = 'input window, operand 2, single buffered']
    #allocation8 [shape = 'u8[8192]{0}', space=vmem, size = 0x2000, scoped, tag = 'input window, operand 3, single buffered']
    #allocation9 [shape = 's32[1]{0}', space=sflag, size = 0x4, scoped, tag = 'scoped memory for tpu_custom_call.1']
    #allocation10 [shape = 'u8[8192]{0}', space=vmem, size = 0x2000, scoped, tag = 'output window, operand 0, single buffered']
    #allocation11 [shape = 'u8[8192]{0}', space=vmem, size = 0x2000, scoped, tag = 'output window, operand 1, single buffered']
    #allocation12 [shape = 's32[1]{0}', space=sflag, size = 0x4, scoped, tag = 'scoped memory for tpu_custom_call.1']
    #allocation13 [shape = 'u8[8192]{0}', space=vmem, size = 0x2000, scoped, tag = 'output window, operand 2, single buffered']
    %12 = vsyncpa [#allocation3], 0
    %13 = vsyncpa [#allocation6], 0
    %14 = vsyncpa [#allocation9], 0
    %15 = vsyncpa [#allocation4], 0
    %16 = vsyncpa [#allocation12], 0
    // Predicated region
    $region2: #{tpu_custom_call.1} parent=1 // pred_check
      _
    $region3: #{tpu_custom_call.1} parent=1 // pred_check_branch
      %18 = sbr.rel (0) target = $region5
    $region4: #{tpu_custom_call.1} parent=1 // pred_region
      %s20 = ssub.s32 128, 128
      %21 = vsyncadd [#allocation3], %s20
      %s23 = sshll.u32 [#allocation2], 4
      %s24 = int_to_ptr.vmem [resolvable:$true] %s23
      %26 = dma.hbm_to_vmem [thread:$0]  %s0, 128, %s24, [#allocation3]
    $region5: #{tpu_custom_call.1} parent=1 // pred_fallthru
      _
    // Predicated region
    $region6: #{tpu_custom_call.1} parent=1 // pred_check
      _
    $region7: #{tpu_custom_call.1} parent=1 // pred_check_branch
      %28 = sbr.rel (0) target = $region9
    $region8: #{tpu_custom_call.1} parent=1 // pred_region
      %s30 = ssub.s32 256, 256
      %31 = vsyncadd [#allocation6], %s30
      %s32 = sshll.u32 [#allocation5], 4
      %s33 = int_to_ptr.vmem [resolvable:$true] %s32
      %38 = dma.hbm_to_vmem [thread:$0]  %s1, 256, %s33, [#allocation6], 128, 128, 8
    $region9: #{tpu_custom_call.1} parent=1 // pred_fallthru
      _
    // Predicated region
    $region10: #{tpu_custom_call.1} parent=1 // pred_check
      _
    $region11: #{tpu_custom_call.1} parent=1 // pred_check_branch
      %40 = sbr.rel (0) target = $region13
    $region12: #{tpu_custom_call.1} parent=1 // pred_region
      %s42 = ssub.s32 256, 256
      %43 = vsyncadd [#allocation6], %s42
      %s44 = sshll.u32 [#allocation7], 4
      %s45 = int_to_ptr.vmem [resolvable:$true] %s44
      %50 = dma.hbm_to_vmem [thread:$0]  %s2, 256, %s45, [#allocation6], 128, 128, 8
    $region13: #{tpu_custom_call.1} parent=1 // pred_fallthru
      _
    // Predicated region
    $region14: #{tpu_custom_call.1} parent=1 // pred_check
      _
    $region15: #{tpu_custom_call.1} parent=1 // pred_check_branch
      %52 = sbr.rel (0) target = $region17
    $region16: #{tpu_custom_call.1} parent=1 // pred_region
      %s54 = ssub.s32 256, 256
      %55 = vsyncadd [#allocation9], %s54
      %s56 = sshll.u32 [#allocation8], 4
      %s57 = int_to_ptr.vmem [resolvable:$true] %s56
      %62 = dma.hbm_to_vmem [thread:$0]  %s3, 256, %s57, [#allocation9], 128, 128, 8
    $region17: #{tpu_custom_call.1} parent=1 // pred_fallthru
      _
    // Predicated region
    $region18: #{tpu_custom_call.1} parent=1 // pred_check
      _
    $region19: #{tpu_custom_call.1} parent=1 // pred_check_branch
      %64 = sbr.rel (0) target = $region21
    $region20: #{tpu_custom_call.1} parent=1 // pred_region
      %65 = dma.done [#allocation3], 128
    $region21: #{tpu_custom_call.1} parent=1 // pred_fallthru
      _
    // Predicated region
    $region22: #{tpu_custom_call.1} parent=1 // pred_check
      _
    $region23: #{tpu_custom_call.1} parent=1 // pred_check_branch
      %67 = sbr.rel (0) target = $region25
    $region24: #{tpu_custom_call.1} parent=1 // pred_region
      %68 = dma.done [#allocation6], 256
    $region25: #{tpu_custom_call.1} parent=1 // pred_fallthru
      _
    // Predicated region
    $region26: #{tpu_custom_call.1} parent=1 // pred_check
      _
    $region27: #{tpu_custom_call.1} parent=1 // pred_check_branch
      %70 = sbr.rel (0) target = $region29
    $region28: #{tpu_custom_call.1} parent=1 // pred_region
      %71 = dma.done [#allocation6], 256
    $region29: #{tpu_custom_call.1} parent=1 // pred_fallthru
      _
    // Predicated region
    $region30: #{tpu_custom_call.1} parent=1 // pred_check
      _
    $region31: #{tpu_custom_call.1} parent=1 // pred_check_branch
      %73 = sbr.rel (0) target = $region33
    $region32: #{tpu_custom_call.1} parent=1 // pred_region
      %74 = dma.done [#allocation9], 256
    $region33: #{tpu_custom_call.1} parent=1 // pred_fallthru
      _
    %v75 = vld [vmem:[#allocation5] sm:$0xff]
    %v76 = vld [vmem:[#allocation5 + $0x8] sm:$0xff]
    %77 = vadd.xlane.f32.xlu0 %v75
    %v78 = vpop.xlane.xlu0 %77
    %79 = vadd.xlane.f32.xlu0 %v76
    %v80 = vpop.xlane.xlu0 %79
    %v81 = vmul.f32 %v75, %v75
    %v82 = vmul.f32 %v76, %v76
    %83 = vadd.xlane.f32.xlu0 %v81
    %v84 = vpop.xlane.xlu0 %83
    %85 = vadd.xlane.f32.xlu0 %v82
    %v86 = vpop.xlane.xlu0 %85
    %v87 = vmul.f32 %v78, 0.0078125
    %v88 = vmul.f32 %v80, 0.0078125
    %v89 = vmul.f32 %v78, %v87
    %v90 = vmul.f32 %v80, %v88
    %v91 = vsub.f32 %v84, %v89
    %v92 = vsub.f32 %v86, %v90
    %v93 = vmul.f32 %v91, 0.007874016
    %v94 = vmul.f32 %v92, 0.007874016
    %v95 = vmax.f32 %v93, 0.0
    %v96 = vmax.f32 %v94, 0.0
    %v97 = vrsqrt.pop %v95
    %v98 = vmul.f32 %v95, %v97
    %vm99 = vcmp.eq.f32.partialorder %v95, inf
    %v100 = vsel %vm99, %v95, %v98
    %vm101 = vcmp.eq.f32.partialorder %v95, 0.0
    %v102 = vand.u32 %v95, 2147483648
    %v103 = vsel %vm101, %v102, %v100
    %v104 = vrsqrt.pop %v96
    %v105 = vmul.f32 %v96, %v104
    %vm106 = vcmp.eq.f32.partialorder %v96, inf
    %v107 = vsel %vm106, %v96, %v105
    %vm108 = vcmp.eq.f32.partialorder %v96, 0.0
    %v109 = vand.u32 %v96, 2147483648
    %v110 = vsel %vm108, %v109, %v107
    %v111 = vadd.f32 %v103, 1e-06
    %v112 = vadd.f32 %v110, 1e-06
    %v113 = vrcp.pop %v111
    %v114 = vrcp.pop %v112
    %v115 = vmul.f32 %v111, %v113
    %v116 = vmul.f32 %v112, %v114
    %v117 = vsub.f32 2.0, %v115
    %v118 = vsub.f32 2.0, %v116
    %v119 = vmul.f32 %v113, %v117
    %v120 = vmul.f32 %v114, %v118
    %v121 = vld [vmem:[#allocation2] sm:$0x1]
    %v122 = vld [vmem:[#allocation2 + $0x1] sm:$0x1]
    %v123 = vsub.f32 %v75, %v87
    %v124 = vsub.f32 %v76, %v88
    %v125 = vmul.f32 %v123, %v119
    %v126 = vmul.f32 %v124, %v120
    %v127 = vlaneseq
    %v128 = vshrl.u32 %v127, 7
    %v129 = vsub.s32 0, %v128
    %v130 = vrot.slane %v121, %v129
    %v131 = vmul.f32 %v125, %v130
    %v132 = vmul.f32 %v126, %v130
    %v133 = vlaneseq
    %v134 = vshrl.u32 %v133, 7
    %v135 = vsub.s32 0, %v134
    %v136 = vrot.slane %v122, %v135
    %v137 = vadd.f32 %v131, %v136
    %v138 = vadd.f32 %v132, %v136
    %139 = vst [vmem:[#allocation10] sm:$0xff] %v137
    %140 = vst [vmem:[#allocation10 + $0x8] sm:$0xff] %v138
    %v141 = vld [vmem:[#allocation7] sm:$0xff]
    %v142 = vld [vmem:[#allocation7 + $0x8] sm:$0xff]
    %143 = vadd.xlane.f32.xlu0 %v141
    %v144 = vpop.xlane.xlu0 %143
    %145 = vadd.xlane.f32.xlu0 %v142
    %v146 = vpop.xlane.xlu0 %145
    %v147 = vmul.f32 %v141, %v141
    %v148 = vmul.f32 %v142, %v142
    %149 = vadd.xlane.f32.xlu0 %v147
    %v150 = vpop.xlane.xlu0 %149
    %151 = vadd.xlane.f32.xlu0 %v148
    %v152 = vpop.xlane.xlu0 %151
    %v153 = vmul.f32 %v144, 0.0078125
    %v154 = vmul.f32 %v146, 0.0078125
    %v155 = vmul.f32 %v144, %v153
    %v156 = vmul.f32 %v146, %v154
    %v157 = vsub.f32 %v150, %v155
    %v158 = vsub.f32 %v152, %v156
    %v159 = vmul.f32 %v157, 0.007874016
    %v160 = vmul.f32 %v158, 0.007874016
    %v161 = vmax.f32 %v159, 0.0
    %v162 = vmax.f32 %v160, 0.0
    %v163 = vrsqrt.pop %v161
    %v164 = vmul.f32 %v161, %v163
    %vm165 = vcmp.eq.f32.partialorder %v161, inf
    %v166 = vsel %vm165, %v161, %v164
    %vm167 = vcmp.eq.f32.partialorder %v161, 0.0
    %v168 = vand.u32 %v161, 2147483648
    %v169 = vsel %vm167, %v168, %v166
    %v170 = vrsqrt.pop %v162
    %v171 = vmul.f32 %v162, %v170
    %vm172 = vcmp.eq.f32.partialorder %v162, inf
    %v173 = vsel %vm172, %v162, %v171
    %vm174 = vcmp.eq.f32.partialorder %v162, 0.0
    %v175 = vand.u32 %v162, 2147483648
    %v176 = vsel %vm174, %v175, %v173
    %v177 = vadd.f32 %v169, 1e-06
    %v178 = vadd.f32 %v176, 1e-06
    %v179 = vrcp.pop %v177
    %v180 = vrcp.pop %v178
    %v181 = vmul.f32 %v177, %v179
    %v182 = vmul.f32 %v178, %v180
    %v183 = vsub.f32 2.0, %v181
    %v184 = vsub.f32 2.0, %v182
    %v185 = vmul.f32 %v179, %v183
    %v186 = vmul.f32 %v180, %v184
    %v187 = vld [vmem:[#allocation2 + $0x2] sm:$0x1]
    %v188 = vld [vmem:[#allocation2 + $0x3] sm:$0x1]
    %v189 = vsub.f32 %v141, %v153
    %v190 = vsub.f32 %v142, %v154
    %v191 = vmul.f32 %v189, %v185
    %v192 = vmul.f32 %v190, %v186
    %v193 = vlaneseq
    %v194 = vshrl.u32 %v193, 7
    %v195 = vsub.s32 0, %v194
    %v196 = vrot.slane %v187, %v195
    %v197 = vmul.f32 %v191, %v196
    %v198 = vmul.f32 %v192, %v196
    %v199 = vlaneseq
    %v200 = vshrl.u32 %v199, 7
    %v201 = vsub.s32 0, %v200
    %v202 = vrot.slane %v188, %v201
    %v203 = vadd.f32 %v197, %v202
    %v204 = vadd.f32 %v198, %v202
    %205 = vst [vmem:[#allocation11] sm:$0xff] %v203
    %206 = vst [vmem:[#allocation11 + $0x8] sm:$0xff] %v204
    %v207 = vld [vmem:[#allocation8] sm:$0xff]
    %v208 = vld [vmem:[#allocation8 + $0x8] sm:$0xff]
    %209 = vadd.xlane.f32.xlu0 %v207
    %v210 = vpop.xlane.xlu0 %209
    %211 = vadd.xlane.f32.xlu0 %v208
    %v212 = vpop.xlane.xlu0 %211
    %v213 = vmul.f32 %v207, %v207
    %v214 = vmul.f32 %v208, %v208
    %215 = vadd.xlane.f32.xlu0 %v213
    %v216 = vpop.xlane.xlu0 %215
    %217 = vadd.xlane.f32.xlu0 %v214
    %v218 = vpop.xlane.xlu0 %217
    %v219 = vmul.f32 %v210, 0.0078125
    %v220 = vmul.f32 %v212, 0.0078125
    %v221 = vmul.f32 %v210, %v219
    %v222 = vmul.f32 %v212, %v220
    %v223 = vsub.f32 %v216, %v221
    %v224 = vsub.f32 %v218, %v222
    %v225 = vmul.f32 %v223, 0.007874016
    %v226 = vmul.f32 %v224, 0.007874016
    %v227 = vmax.f32 %v225, 0.0
    %v228 = vmax.f32 %v226, 0.0
    %v229 = vrsqrt.pop %v227
    %v230 = vmul.f32 %v227, %v229
    %vm231 = vcmp.eq.f32.partialorder %v227, inf
    %v232 = vsel %vm231, %v227, %v230
    %vm233 = vcmp.eq.f32.partialorder %v227, 0.0
    %v234 = vand.u32 %v227, 2147483648
    %v235 = vsel %vm233, %v234, %v232
    %v236 = vrsqrt.pop %v228
    %v237 = vmul.f32 %v228, %v236
    %vm238 = vcmp.eq.f32.partialorder %v228, inf
    %v239 = vsel %vm238, %v228, %v237
    %vm240 = vcmp.eq.f32.partialorder %v228, 0.0
    %v241 = vand.u32 %v228, 2147483648
    %v242 = vsel %vm240, %v241, %v239
    %v243 = vadd.f32 %v235, 1e-06
    %v244 = vadd.f32 %v242, 1e-06
    %v245 = vrcp.pop %v243
    %v246 = vrcp.pop %v244
    %v247 = vmul.f32 %v243, %v245
    %v248 = vmul.f32 %v244, %v246
    %v249 = vsub.f32 2.0, %v247
    %v250 = vsub.f32 2.0, %v248
    %v251 = vmul.f32 %v245, %v249
    %v252 = vmul.f32 %v246, %v250
    %v253 = vld [vmem:[#allocation2 + $0x4] sm:$0x1]
    %v254 = vld [vmem:[#allocation2 + $0x5] sm:$0x1]
    %v255 = vsub.f32 %v207, %v219
    %v256 = vsub.f32 %v208, %v220
    %v257 = vmul.f32 %v255, %v251
    %v258 = vmul.f32 %v256, %v252
    %v259 = vlaneseq
    %v260 = vshrl.u32 %v259, 7
    %v261 = vsub.s32 0, %v260
    %v262 = vrot.slane %v253, %v261
    %v263 = vmul.f32 %v257, %v262
    %v264 = vmul.f32 %v258, %v262
    %v265 = vlaneseq
    %v266 = vshrl.u32 %v265, 7
    %v267 = vsub.s32 0, %v266
    %v268 = vrot.slane %v254, %v267
    %v269 = vadd.f32 %v263, %v268
    %v270 = vadd.f32 %v264, %v268
    %271 = vst [vmem:[#allocation13] sm:$0xff] %v269
    %272 = vst [vmem:[#allocation13 + $0x8] sm:$0xff] %v270
    // Predicated region
    $region34: #{tpu_custom_call.1} parent=1 // pred_check
      _
    $region35: #{tpu_custom_call.1} parent=1 // pred_check_branch
      %274 = sbr.rel (0) target = $region37
    $region36: #{tpu_custom_call.1} parent=1 // pred_region
      %s276 = ssub.s32 256, 256
      %277 = vsyncadd [#allocation4], %s276
      %s278 = sshll.u32 [#allocation10], 4
      %s279 = int_to_ptr.vmem [resolvable:$true] %s278
      %284 = dma.vmem_to_hbm [thread:$0]  %s279, 256, %s4, [#allocation4], 128, 128, 8
    $region37: #{tpu_custom_call.1} parent=1 // pred_fallthru
      _
    // Predicated region
    $region38: #{tpu_custom_call.1} parent=1 // pred_check
      _
    $region39: #{tpu_custom_call.1} parent=1 // pred_check_branch
      %286 = sbr.rel (0) target = $region41
    $region40: #{tpu_custom_call.1} parent=1 // pred_region
      %s288 = ssub.s32 256, 256
      %289 = vsyncadd [#allocation12], %s288
      %s290 = sshll.u32 [#allocation11], 4
      %s291 = int_to_ptr.vmem [resolvable:$true] %s290
      %296 = dma.vmem_to_hbm [thread:$0]  %s291, 256, %s5, [#allocation12], 128, 128, 8
    $region41: #{tpu_custom_call.1} parent=1 // pred_fallthru
      _
    // Predicated region
    $region42: #{tpu_custom_call.1} parent=1 // pred_check
      _
    $region43: #{tpu_custom_call.1} parent=1 // pred_check_branch
      %298 = sbr.rel (0) target = $region45
    $region44: #{tpu_custom_call.1} parent=1 // pred_region
      %s300 = ssub.s32 256, 256
      %301 = vsyncadd [#allocation12], %s300
      %s302 = sshll.u32 [#allocation13], 4
      %s303 = int_to_ptr.vmem [resolvable:$true] %s302
      %308 = dma.vmem_to_hbm [thread:$0]  %s303, 256, %s6, [#allocation12], 128, 128, 8
    $region45: #{tpu_custom_call.1} parent=1 // pred_fallthru
      _
    // Predicated region
    $region46: #{tpu_custom_call.1} parent=1 // pred_check
      _
    $region47: #{tpu_custom_call.1} parent=1 // pred_check_branch
      %310 = sbr.rel (0) target = $region49
    $region48: #{tpu_custom_call.1} parent=1 // pred_region
      %311 = dma.done [#allocation4], 256
    $region49: #{tpu_custom_call.1} parent=1 // pred_fallthru
      _
    // Predicated region
    $region50: #{tpu_custom_call.1} parent=1 // pred_check
      _
    $region51: #{tpu_custom_call.1} parent=1 // pred_check_branch
      %313 = sbr.rel (0) target = $region53
    $region52: #{tpu_custom_call.1} parent=1 // pred_region
      %314 = dma.done [#allocation12], 256
    $region53: #{tpu_custom_call.1} parent=1 // pred_fallthru
      _
    // Predicated region
    $region54: #{tpu_custom_call.1} parent=1 // pred_check
      _
    $region55: #{tpu_custom_call.1} parent=1 // pred_check_branch
      %316 = sbr.rel (0) target = $region57
    $region56: #{tpu_custom_call.1} parent=1 // pred_region
      %317 = dma.done [#allocation12], 256
    $region57: #{tpu_custom_call.1} parent=1 // pred_fallthru
      _
    %318 = vsyncpa [#allocation3], 1
    %319 = vsyncpa [#allocation6], 1
    %320 = vsyncpa [#allocation9], 1
    %321 = vsyncpa [#allocation4], 1
    %322 = vsyncpa [#allocation12], 1

</llo_original>
